<compile_context>
chip_gen: v7x
topology: tpu7x:2x2x1
jax: 0.10.0
libtpu: 0.0.40
codegen_flags: <defaults>
</compile_context>

<pallas_src>
import functools

import jax
import jax.numpy as jnp
from jax.experimental import pallas as pl
from jax.experimental.pallas import tpu as pltpu


def _round_up(x: int, m: int) -> int:
    return (x + m - 1) // m * m


# ---------------------------------------------------------------------------
# rank_tags kernel (gathers fused in, all contractions on the MXU)
# ---------------------------------------------------------------------------
def _rank_tags_kernel(uid_ref, iid_ref,      # [b_tile, 1] int32 index columns
                      tag_ref,               # [b_tile, C_pad] int32 candidate ids
                      utab_ref, itab_ref,    # [U, E], [I, E] f32, VMEM resident
                      ttab_ref,              # [E, T_pad] bf16, VMEM resident
                      o_ref,                 # [b_tile, C_pad] f32 output
                      *, b_tile: int, t_chunk: int):
    num_users = utab_ref.shape[0]
    num_items = itab_ref.shape[0]
    c_pad = tag_ref.shape[1]
    t_pad = ttab_ref.shape[1]

    # ---- fused user/item row gather: one-hot MXU matmul against the
    # VMEM-resident tables (no HBM DMAs, no scalar row loop). f32 one-hot
    # times f32 table reproduces the embedding rows exactly.
    uid = uid_ref[...]                                    # [b_tile, 1]
    iid = iid_ref[...]                                    # [b_tile, 1]
    u_onehot = (uid == jax.lax.broadcasted_iota(
        jnp.int32, (b_tile, num_users), 1)).astype(jnp.float32)
    i_onehot = (iid == jax.lax.broadcasted_iota(
        jnp.int32, (b_tile, num_items), 1)).astype(jnp.float32)
    u_rows = jax.lax.dot_general(u_onehot, utab_ref[...],
                                 (((1,), (0,)), ((), ())),
                                 preferred_element_type=jnp.float32)
    i_rows = jax.lax.dot_general(i_onehot, itab_ref[...],
                                 (((1,), (0,)), ((), ())),
                                 preferred_element_type=jnp.float32)
    # bf16 MXU feed for the streamed contraction (f32 accumulation below).
    ui = (u_rows + i_rows).astype(jnp.bfloat16)           # [b_tile, E]

    # ---- MXU contraction 1: scores of (u + i) against every tag.
    # bf16 x bf16 at native MXU rate, f32 accumulate.
    all_scores = jax.lax.dot_general(ui, ttab_ref[...],
                                     (((1,), (0,)), ((), ())),
                                     preferred_element_type=jnp.float32)
    # [b_tile, T_pad] f32

    # ---- MXU contraction 2: one-hot candidate selection, chunked over the
    # tag vocabulary so the [b_tile, C_pad, t_chunk] one-hot stays small.
    tags = tag_ref[...]                                   # [b_tile, C_pad]
    acc = jnp.zeros((b_tile, 1, c_pad), jnp.float32)
    for c0 in range(0, t_pad, t_chunk):
        tc = min(t_chunk, t_pad - c0)
        iota = c0 + jax.lax.broadcasted_iota(jnp.int32, (b_tile, c_pad, tc), 2)
        onehot = (tags[:, :, None] == iota).astype(jnp.bfloat16)
        sc = all_scores[:, None, c0:c0 + tc].astype(jnp.bfloat16)
        acc = acc + jax.lax.dot_general(
            sc, onehot, (((2,), (2,)), ((0,), (0,))),     # contract t, batch b
            preferred_element_type=jnp.float32)           # [b_tile, 1, c_pad]

    # ---- dense (b_tile, C_pad) store: write each batch row of the batched
    # dot result into the 2D output tile (leading-dim slices, row stores).
    for r in range(b_tile):
        o_ref[r, :] = acc[r, 0, :]


def rank_tags_pallas(user_idx, item_idx, tag_idx, user_tab, item_tab, tag_tab,
                     *, b_tile=None, t_chunk=256):
    """scores[b, c] = <u[user[b]] + i[item[b]], tag_table[tag[b, c]]>  -> [B, C]."""
    B, C = tag_idx.shape
    num_users, E = user_tab.shape
    num_items = item_tab.shape[0]
    T = tag_tab.shape[0]

    C_pad = _round_up(max(C, 128), 128)                   # lane-dense candidates
    T_pad = _round_up(max(T, 128), 128)                   # lane-dense tag axis
    if b_tile is None:
        # v5e/v6e: for production batches raise b_tile to 128-256 so the first
        # matmul fills the MXU rows (128 MiB VMEM easily holds the blocks; raise
        # vmem_limit_bytes toward ~96 MiB).  v7x: keep blocks within the ~48 MiB
        # scoped budget and make sure B_pad // b_tile >= 2 so the "parallel"
        # grid axis actually splits across the two TensorCores.
        b_tile = min(128, _round_up(B, 8))
    b_tile = _round_up(b_tile, 8)
    B_pad = _round_up(B, b_tile)
    t_chunk = min(_round_up(t_chunk, 128), T_pad)

    uidx = jnp.pad(user_idx.astype(jnp.int32), (0, B_pad - B)).reshape(B_pad, 1)
    iidx = jnp.pad(item_idx.astype(jnp.int32), (0, B_pad - B)).reshape(B_pad, 1)
    tags = jnp.pad(tag_idx.astype(jnp.int32), ((0, B_pad - B), (0, C_pad - C)))
    # [E, T_pad] bf16; zero-padded tag columns are never selected by real ids.
    ttab_t = jnp.pad(jnp.swapaxes(tag_tab, 0, 1), ((0, 0), (0, T_pad - T)))

    kernel = functools.partial(_rank_tags_kernel, b_tile=b_tile, t_chunk=t_chunk)
    flops = (2 * B_pad * (num_users + num_items) * E      # one-hot gathers
             + 2 * B_pad * T_pad * E                      # scores vs all tags
             + 2 * B_pad * C_pad * T_pad)                 # candidate selection
    bytes_accessed = (B_pad * C_pad * 4                   # candidate ids
                      + B_pad * C_pad * 4                 # output
                      + 2 * B_pad * 4                     # user/item ids
                      + (num_users + num_items) * E * 4   # resident f32 tables
                      + E * T_pad * 2)                    # resident bf16 tag table

    out = pl.pallas_call(
        kernel,
        out_shape=jax.ShapeDtypeStruct((B_pad, C_pad), jnp.float32),
        grid=(B_pad // b_tile,),
        in_specs=[
            pl.BlockSpec((b_tile, 1), lambda b: (b, 0)),       # user ids
            pl.BlockSpec((b_tile, 1), lambda b: (b, 0)),       # item ids
            pl.BlockSpec((b_tile, C_pad), lambda b: (b, 0)),   # candidate tag ids
            pl.BlockSpec((num_users, E), lambda b: (0, 0)),    # user table (resident)
            pl.BlockSpec((num_items, E), lambda b: (0, 0)),    # item table (resident)
            pl.BlockSpec((E, T_pad), lambda b: (0, 0)),        # tag table (resident, bf16)
        ],
        out_specs=pl.BlockSpec((b_tile, C_pad), lambda b: (b, 0)),
        compiler_params=pltpu.CompilerParams(
            dimension_semantics=("parallel",),           # B-tiles shard across TCs
            vmem_limit_bytes=48 * 1024 * 1024,           # safe on v7x's 64 MiB VMEM
        ),
        cost_estimate=pl.CostEstimate(flops=int(flops), transcendentals=0,
                                      bytes_accessed=int(bytes_accessed)),
    )(uidx, iidx, tags, user_tab, item_tab, ttab_t)

    return out[:B, :C]


# ---------------------------------------------------------------------------
# LRPPM model (parameters + glue; the bmm hot path uses the Pallas kernel)
# ---------------------------------------------------------------------------
class LRPPMPallas:
    def __init__(self, config, key):
        self.candidate_num = config["candidate_num"]
        E = config["embedding_size"]
        ks = jax.random.split(key, 5)

        def emb(k, n, dtype):
            # nn.Embedding init: normal(mean=0, std=0.01)
            return (0.01 * jax.random.normal(k, (n, E), jnp.float32)).astype(dtype)

        self.user_embeddings = emb(ks[0], config["user_num"], jnp.float32)
        self.item_embeddings = emb(ks[1], config["item_num"], jnp.float32)
        # streamed operand of rank_tags -> bf16 halves bytes; f32 accumulate in-kernel
        self.reason_tag_embeddings = emb(ks[2], config["tag_num"], jnp.bfloat16)
        self.video_tag_embeddings = emb(ks[3], config["tag_num"], jnp.bfloat16)
        self.interest_tag_embeddings = emb(ks[4], config["tag_num"], jnp.bfloat16)
        # TODO(synk): BPRLoss / MSELoss training objectives not implemented
        # (BPRLoss definition is not part of the provided module source).

    def _tag_table(self, tag_type):
        if tag_type == 0:
            return self.reason_tag_embeddings
        elif tag_type == 1:
            return self.video_tag_embeddings
        return self.interest_tag_embeddings

    # Tiny dot products: plain JAX on purpose (a pallas_call launch here is
    # pure overhead; XLA fuses them into the caller).
    def predict_rating(self, user, item):
        u = self.user_embeddings[user]
        i = self.item_embeddings[item]
        return jnp.sum(u * i, axis=-1)

    def predict_uit_score(self, user, item, tag, tag_type):
        u = self.user_embeddings[user]
        i = self.item_embeddings[item]
        t = self._tag_table(tag_type)[tag].astype(jnp.float32)
        return jnp.sum(u * t, -1) + jnp.sum(i * t, -1) + jnp.sum(u * i, -1)

    # The bmm hot path: Pallas kernel with fused (one-hot MXU) gathers.
    def rank_tags(self, user, item, tag, tag_type):
        return rank_tags_pallas(user, item, tag,
                                self.user_embeddings, self.item_embeddings,
                                self._tag_table(tag_type))


# ---------------------------------------------------------------------------
# Pure-JAX reference (correctness check)
# ---------------------------------------------------------------------------
def rank_tags_ref(user_tab, item_tab, tag_tab, user, item, tag):
    u = user_tab[user].astype(jnp.float32)                # [B, E]
    i = item_tab[item].astype(jnp.float32)                # [B, E]
    t = tag_tab[tag].astype(jnp.float32)                  # [B, C, E]
    return jnp.sum((u + i)[:, None, :] * t, axis=-1)      # [B, C]


if __name__ == "__main__":
    config = {
        "user_num": 32,
        "item_num": 48,
        "tag_num": 64,
        "embedding_size": 32,
        "candidate_num": 8,
    }
    model = LRPPMPallas(config, jax.random.PRNGKey(0))

    B, C = 8, config["candidate_num"]
    k1, k2, k3, k4 = jax.random.split(jax.random.PRNGKey(1), 4)
    user = jax.random.randint(k1, (B,), 0, config["user_num"])
    item = jax.random.randint(k2, (B,), 0, config["item_num"])
    tags = jax.random.randint(k3, (B, C), 0, config["tag_num"])
    pos_tag = jax.random.randint(k4, (B,), 0, config["tag_num"])

    # rank_tags -- the Pallas hot path (fused gathers + bf16 MXU contractions)
    scores = jax.block_until_ready(model.rank_tags(user, item, tags, tag_type=0))
    ref = rank_tags_ref(model.user_embeddings, model.item_embeddings,
                        model.reason_tag_embeddings, user, item, tags)
    assert scores.shape == (B, C)
    # bf16 feeds in the kernel -> loosen tolerance vs. the f32 reference.
    assert bool(jnp.allclose(scores, ref, atol=3e-4, rtol=2e-2)), \
        float(jnp.max(jnp.abs(scores - ref)))

    # tiny paths (plain JAX by design)
    uit = jax.block_until_ready(model.predict_uit_score(user, item, pos_tag, 1))
    assert uit.shape == (B,) and bool(jnp.all(jnp.isfinite(uit)))
    rating = jax.block_until_ready(model.predict_rating(user, item))
    assert rating.shape == (B,) and bool(jnp.all(jnp.isfinite(rating)))

    print("KERNEL_OK")
</pallas_src>

<mosaic_0001>
module attributes {stable_mosaic.version = 11 : i64} {
  func.func @_rank_tags_kernel(%arg0: i32, %arg1: memref<8x1xi32, #tpu.memory_space<vmem>>, %arg2: memref<8x1xi32, #tpu.memory_space<vmem>>, %arg3: memref<8x128xi32, #tpu.memory_space<vmem>>, %arg4: memref<32x32xf32, #tpu.memory_space<vmem>>, %arg5: memref<48x32xf32, #tpu.memory_space<vmem>>, %arg6: memref<32x128xbf16, #tpu.memory_space<vmem>>, %arg7: memref<8x128xf32, #tpu.memory_space<vmem>>) attributes {dimension_semantics = [#tpu.dimension_semantics<parallel>], iteration_bounds = array<i64: 1>, scalar_prefetch = 0 : i64, scratch_operands = 0 : i64, tpu.core_type = #tpu.core_type<tc>, window_params = [{transform_indices = @transform_0, window_bounds = array<i64: 8, 1>}, {transform_indices = @transform_1, window_bounds = array<i64: 8, 1>}, {transform_indices = @transform_2, window_bounds = array<i64: 8, 128>}, {pipeline_mode = #tpu.pipeline_mode<synchronous>, transform_indices = @transform_3, window_bounds = array<i64: 32, 32>}, {pipeline_mode = #tpu.pipeline_mode<synchronous>, transform_indices = @transform_4, window_bounds = array<i64: 48, 32>}, {pipeline_mode = #tpu.pipeline_mode<synchronous>, transform_indices = @transform_5, window_bounds = array<i64: 32, 128>}, {transform_indices = @transform_6, window_bounds = array<i64: 8, 128>}]} {
    %c0 = arith.constant 0 : index
    %c0_0 = arith.constant 0 : index
    %0 = vector.load %arg1[%c0, %c0_0] : memref<8x1xi32, #tpu.memory_space<vmem>>, vector<8x1xi32>
    %c0_1 = arith.constant 0 : index
    %c0_2 = arith.constant 0 : index
    %1 = vector.load %arg2[%c0_1, %c0_2] : memref<8x1xi32, #tpu.memory_space<vmem>>, vector<8x1xi32>
    %2 = tpu.iota {dimensions = array<i32: 1>} : vector<8x32xi32>
    %3 = vector.broadcast %0 : vector<8x1xi32> to vector<8x32xi32>
    %4 = arith.cmpi eq, %3, %2 : vector<8x32xi32>
    %5 = arith.extui %4 : vector<8x32xi1> to vector<8x32xi32>
    %6 = arith.sitofp %5 : vector<8x32xi32> to vector<8x32xf32>
    %7 = tpu.iota {dimensions = array<i32: 1>} : vector<8x48xi32>
    %8 = vector.broadcast %1 : vector<8x1xi32> to vector<8x48xi32>
    %9 = arith.cmpi eq, %8, %7 : vector<8x48xi32>
    %10 = arith.extui %9 : vector<8x48xi1> to vector<8x48xi32>
    %11 = arith.sitofp %10 : vector<8x48xi32> to vector<8x48xf32>
    %c0_3 = arith.constant 0 : index
    %c0_4 = arith.constant 0 : index
    %12 = vector.load %arg4[%c0_3, %c0_4] : memref<32x32xf32, #tpu.memory_space<vmem>>, vector<32x32xf32>
    %cst = arith.constant dense<0.000000e+00> : vector<8x32xf32>
    %13 = tpu.matmul %6, %12, %cst {dimension_numbers = #tpu.dot_dimension_numbers<[1], [0], [0], [1], [0, 0, 1, 1], [], []>} : vector<8x32xf32>, vector<32x32xf32>, vector<8x32xf32> -> vector<8x32xf32>
    %c0_5 = arith.constant 0 : index
    %c0_6 = arith.constant 0 : index
    %14 = vector.load %arg5[%c0_5, %c0_6] : memref<48x32xf32, #tpu.memory_space<vmem>>, vector<48x32xf32>
    %cst_7 = arith.constant dense<0.000000e+00> : vector<8x32xf32>
    %15 = tpu.matmul %11, %14, %cst_7 {dimension_numbers = #tpu.dot_dimension_numbers<[1], [0], [0], [1], [0, 0, 1, 1], [], []>} : vector<8x48xf32>, vector<48x32xf32>, vector<8x32xf32> -> vector<8x32xf32>
    %16 = arith.addf %13, %15 : vector<8x32xf32>
    %17 = arith.truncf %16 : vector<8x32xf32> to vector<8x32xbf16>
    %c0_8 = arith.constant 0 : index
    %c0_9 = arith.constant 0 : index
    %18 = vector.load %arg6[%c0_8, %c0_9] : memref<32x128xbf16, #tpu.memory_space<vmem>>, vector<32x128xbf16>
    %cst_10 = arith.constant dense<0.000000e+00> : vector<8x128xf32>
    %19 = tpu.matmul %17, %18, %cst_10 {dimension_numbers = #tpu.dot_dimension_numbers<[1], [0], [0], [1], [0, 0, 1, 1], [], []>} : vector<8x32xbf16>, vector<32x128xbf16>, vector<8x128xf32> -> vector<8x128xf32>
    %c0_11 = arith.constant 0 : index
    %c0_12 = arith.constant 0 : index
    %20 = vector.load %arg3[%c0_11, %c0_12] : memref<8x128xi32, #tpu.memory_space<vmem>>, vector<8x128xi32>
    %cst_13 = arith.constant 0.000000e+00 : f32
    %21 = vector.broadcast %cst_13 : f32 to vector<8x1x128xf32>
    %22 = tpu.iota {dimensions = array<i32: 2>} : vector<8x128x128xi32>
    %c0_i32 = arith.constant 0 : i32
    %23 = vector.broadcast %c0_i32 : i32 to vector<8x128x128xi32>
    %24 = arith.addi %23, %22 : vector<8x128x128xi32>
    %25 = vector.shape_cast %20 : vector<8x128xi32> to vector<8x128x1xi32>
    %26 = vector.broadcast %25 : vector<8x128x1xi32> to vector<8x128x128xi32>
    %27 = arith.cmpi eq, %26, %24 : vector<8x128x128xi32>
    %28 = arith.extui %27 : vector<8x128x128xi1> to vector<8x128x128xi32>
    %29 = arith.sitofp %28 : vector<8x128x128xi32> to vector<8x128x128xf32>
    %30 = arith.truncf %29 : vector<8x128x128xf32> to vector<8x128x128xbf16>
    %31 = vector.shape_cast %19 : vector<8x128xf32> to vector<8x1x128xf32>
    %32 = arith.truncf %31 : vector<8x1x128xf32> to vector<8x1x128xbf16>
    %cst_14 = arith.constant dense<0.000000e+00> : vector<8x1x128xf32>
    %33 = tpu.matmul %32, %30, %cst_14 {dimension_numbers = #tpu.dot_dimension_numbers<[2], [2], [1], [1], [0, 0, 0, 1, 1, 1], [0], [0]>} : vector<8x1x128xbf16>, vector<8x128x128xbf16>, vector<8x1x128xf32> -> vector<8x1x128xf32>
    %34 = arith.addf %21, %33 : vector<8x1x128xf32>
    %35 = vector.extract_strided_slice %34 {offsets = [0, 0, 0], sizes = [1, 1, 128], strides = [1, 1, 1]} : vector<8x1x128xf32> to vector<1x1x128xf32>
    %36 = vector.shape_cast %35 : vector<1x1x128xf32> to vector<128xf32>
    %c0_15 = arith.constant 0 : index
    %c0_16 = arith.constant 0 : index
    %37 = vector.load %arg7[%c0_15, %c0_16] : memref<8x128xf32, #tpu.memory_space<vmem>>, vector<1x128xf32>
    %38 = vector.shape_cast %37 : vector<1x128xf32> to vector<128xf32>
    %39 = vector.shape_cast %36 : vector<128xf32> to vector<1x128xf32>
    tpu.vector_store %arg7[%c0_15, %c0_16], %39 {strides = array<i32>} : memref<8x128xf32, #tpu.memory_space<vmem>>, vector<1x128xf32>,
    %40 = vector.extract_strided_slice %34 {offsets = [1, 0, 0], sizes = [1, 1, 128], strides = [1, 1, 1]} : vector<8x1x128xf32> to vector<1x1x128xf32>
    %41 = vector.shape_cast %40 : vector<1x1x128xf32> to vector<128xf32>
    %c1 = arith.constant 1 : index
    %c0_17 = arith.constant 0 : index
    %42 = vector.load %arg7[%c1, %c0_17] : memref<8x128xf32, #tpu.memory_space<vmem>>, vector<1x128xf32>
    %43 = vector.shape_cast %42 : vector<1x128xf32> to vector<128xf32>
    %44 = vector.shape_cast %41 : vector<128xf32> to vector<1x128xf32>
    tpu.vector_store %arg7[%c1, %c0_17], %44 {strides = array<i32>} : memref<8x128xf32, #tpu.memory_space<vmem>>, vector<1x128xf32>,
    %45 = vector.extract_strided_slice %34 {offsets = [2, 0, 0], sizes = [1, 1, 128], strides = [1, 1, 1]} : vector<8x1x128xf32> to vector<1x1x128xf32>
    %46 = vector.shape_cast %45 : vector<1x1x128xf32> to vector<128xf32>
    %c2 = arith.constant 2 : index
    %c0_18 = arith.constant 0 : index
    %47 = vector.load %arg7[%c2, %c0_18] : memref<8x128xf32, #tpu.memory_space<vmem>>, vector<1x128xf32>
    %48 = vector.shape_cast %47 : vector<1x128xf32> to vector<128xf32>
    %49 = vector.shape_cast %46 : vector<128xf32> to vector<1x128xf32>
    tpu.vector_store %arg7[%c2, %c0_18], %49 {strides = array<i32>} : memref<8x128xf32, #tpu.memory_space<vmem>>, vector<1x128xf32>,
    %50 = vector.extract_strided_slice %34 {offsets = [3, 0, 0], sizes = [1, 1, 128], strides = [1, 1, 1]} : vector<8x1x128xf32> to vector<1x1x128xf32>
    %51 = vector.shape_cast %50 : vector<1x1x128xf32> to vector<128xf32>
    %c3 = arith.constant 3 : index
    %c0_19 = arith.constant 0 : index
    %52 = vector.load %arg7[%c3, %c0_19] : memref<8x128xf32, #tpu.memory_space<vmem>>, vector<1x128xf32>
    %53 = vector.shape_cast %52 : vector<1x128xf32> to vector<128xf32>
    %54 = vector.shape_cast %51 : vector<128xf32> to vector<1x128xf32>
    tpu.vector_store %arg7[%c3, %c0_19], %54 {strides = array<i32>} : memref<8x128xf32, #tpu.memory_space<vmem>>, vector<1x128xf32>,
    %55 = vector.extract_strided_slice %34 {offsets = [4, 0, 0], sizes = [1, 1, 128], strides = [1, 1, 1]} : vector<8x1x128xf32> to vector<1x1x128xf32>
    %56 = vector.shape_cast %55 : vector<1x1x128xf32> to vector<128xf32>
    %c4 = arith.constant 4 : index
    %c0_20 = arith.constant 0 : index
    %57 = vector.load %arg7[%c4, %c0_20] : memref<8x128xf32, #tpu.memory_space<vmem>>, vector<1x128xf32>
    %58 = vector.shape_cast %57 : vector<1x128xf32> to vector<128xf32>
    %59 = vector.shape_cast %56 : vector<128xf32> to vector<1x128xf32>
    tpu.vector_store %arg7[%c4, %c0_20], %59 {strides = array<i32>} : memref<8x128xf32, #tpu.memory_space<vmem>>, vector<1x128xf32>,
    %60 = vector.extract_strided_slice %34 {offsets = [5, 0, 0], sizes = [1, 1, 128], strides = [1, 1, 1]} : vector<8x1x128xf32> to vector<1x1x128xf32>
    %61 = vector.shape_cast %60 : vector<1x1x128xf32> to vector<128xf32>
    %c5 = arith.constant 5 : index
    %c0_21 = arith.constant 0 : index
    %62 = vector.load %arg7[%c5, %c0_21] : memref<8x128xf32, #tpu.memory_space<vmem>>, vector<1x128xf32>
    %63 = vector.shape_cast %62 : vector<1x128xf32> to vector<128xf32>
    %64 = vector.shape_cast %61 : vector<128xf32> to vector<1x128xf32>
    tpu.vector_store %arg7[%c5, %c0_21], %64 {strides = array<i32>} : memref<8x128xf32, #tpu.memory_space<vmem>>, vector<1x128xf32>,
    %65 = vector.extract_strided_slice %34 {offsets = [6, 0, 0], sizes = [1, 1, 128], strides = [1, 1, 1]} : vector<8x1x128xf32> to vector<1x1x128xf32>
    %66 = vector.shape_cast %65 : vector<1x1x128xf32> to vector<128xf32>
    %c6 = arith.constant 6 : index
    %c0_22 = arith.constant 0 : index
    %67 = vector.load %arg7[%c6, %c0_22] : memref<8x128xf32, #tpu.memory_space<vmem>>, vector<1x128xf32>
    %68 = vector.shape_cast %67 : vector<1x128xf32> to vector<128xf32>
    %69 = vector.shape_cast %66 : vector<128xf32> to vector<1x128xf32>
    tpu.vector_store %arg7[%c6, %c0_22], %69 {strides = array<i32>} : memref<8x128xf32, #tpu.memory_space<vmem>>, vector<1x128xf32>,
    %70 = vector.extract_strided_slice %34 {offsets = [7, 0, 0], sizes = [1, 1, 128], strides = [1, 1, 1]} : vector<8x1x128xf32> to vector<1x1x128xf32>
    %71 = vector.shape_cast %70 : vector<1x1x128xf32> to vector<128xf32>
    %c7 = arith.constant 7 : index
    %c0_23 = arith.constant 0 : index
    %72 = vector.load %arg7[%c7, %c0_23] : memref<8x128xf32, #tpu.memory_space<vmem>>, vector<1x128xf32>
    %73 = vector.shape_cast %72 : vector<1x128xf32> to vector<128xf32>
    %74 = vector.shape_cast %71 : vector<128xf32> to vector<1x128xf32>
    tpu.vector_store %arg7[%c7, %c0_23], %74 {strides = array<i32>} : memref<8x128xf32, #tpu.memory_space<vmem>>, vector<1x128xf32>,
    return
  }
  func.func @transform_0(%arg0: i32) -> (i32, i32) {
    %c0_i32 = arith.constant 0 : i32
    %c0_i32_0 = arith.constant 0 : i32
    return %arg0, %c0_i32 : i32, i32
  }
  func.func @transform_1(%arg0: i32) -> (i32, i32) {
    %c0_i32 = arith.constant 0 : i32
    %c0_i32_0 = arith.constant 0 : i32
    return %arg0, %c0_i32 : i32, i32
  }
  func.func @transform_2(%arg0: i32) -> (i32, i32) {
    %c0_i32 = arith.constant 0 : i32
    %c0_i32_0 = arith.constant 0 : i32
    return %arg0, %c0_i32 : i32, i32
  }
  func.func @transform_3(%arg0: i32) -> (i32, i32) {
    %c0_i32 = arith.constant 0 : i32
    %c0_i32_0 = arith.constant 0 : i32
    %c0_i32_1 = arith.constant 0 : i32
    return %c0_i32, %c0_i32_0 : i32, i32
  }
  func.func @transform_4(%arg0: i32) -> (i32, i32) {
    %c0_i32 = arith.constant 0 : i32
    %c0_i32_0 = arith.constant 0 : i32
    %c0_i32_1 = arith.constant 0 : i32
    return %c0_i32, %c0_i32_0 : i32, i32
  }
  func.func @transform_5(%arg0: i32) -> (i32, i32) {
    %c0_i32 = arith.constant 0 : i32
    %c0_i32_0 = arith.constant 0 : i32
    %c0_i32_1 = arith.constant 0 : i32
    return %c0_i32, %c0_i32_0 : i32, i32
  }
  func.func @transform_6(%arg0: i32) -> (i32, i32) {
    %c0_i32 = arith.constant 0 : i32
    %c0_i32_0 = arith.constant 0 : i32
    return %arg0, %c0_i32 : i32, i32
  }
}

</mosaic_0001>

<llo_original>
// kernel: tpu_custom_call.1
$region0: #{tpu_custom_call.1}
  #allocation0 [shape = 'u32[]', space=smem, size = 0x4, offset = 0x4, fixed_abs, tag = 'smem constant byte address 0x4 - core index']
  #allocation1 [shape = 'u32[144,128]{1,0:T(1,128)}', space=vmem, size = 0x12000, scoped, tag = 'internal scratch']
  %s0 = inlined_call_operand.vmem [shape: s32[8,1], index: 0, kind: input, shape index: {}]
  %s1 = inlined_call_operand.vmem [shape: s32[8,1], index: 1, kind: input, shape index: {}]
  %s2 = inlined_call_operand.vmem [shape: s32[8,128], index: 2, kind: input, shape index: {}]
  %s3 = inlined_call_operand.vmem [shape: f32[32,32], index: 3, kind: input, shape index: {}]
  %s4 = inlined_call_operand.vmem [shape: f32[48,32], index: 4, kind: input, shape index: {}]
  %s5 = inlined_call_operand.vmem [shape: bf16[32,128], index: 5, kind: input, shape index: {}]
  %s6 = inlined_call_operand.hbm [shape: f32[8,128], index: 6, kind: output, shape index: {}]
  %s7 = sld [smem:[#allocation0]]
  $region34: #{tpu_custom_call.1} parent=0
    _
  %s9 = ssub.s32 1, %s7
  %s10 = scalar_select 0, %s9, %s7
  $region1: #{tpu_custom_call.1} parent=0
    #allocation2 [shape = 'u8[4096]{0}', space=vmem, size = 0x1000, scoped, tag = 'output window, operand 0, single buffered']
    #allocation3 [shape = 's32[1]{0}', space=sflag, size = 0x4, scoped, tag = 'scoped memory for tpu_custom_call.1']
    %11 = vsyncpa [#allocation3], 0
    // Predicated region
    $region2: #{tpu_custom_call.1} parent=1 // pred_check
      _
    $region3: #{tpu_custom_call.1} parent=1 // pred_check_branch
      %13 = sbr.rel (0) target = $region5
    $region4: #{tpu_custom_call.1} parent=1 // pred_region
      _
    $region5: #{tpu_custom_call.1} parent=1 // pred_fallthru
      _
    // Predicated region
    $region6: #{tpu_custom_call.1} parent=1 // pred_check
      _
    $region7: #{tpu_custom_call.1} parent=1 // pred_check_branch
      %15 = sbr.rel (0) target = $region9
    $region8: #{tpu_custom_call.1} parent=1 // pred_region
      _
    $region9: #{tpu_custom_call.1} parent=1 // pred_fallthru
      _
    // Predicated region
    $region10: #{tpu_custom_call.1} parent=1 // pred_check
      _
    $region11: #{tpu_custom_call.1} parent=1 // pred_check_branch
      %17 = sbr.rel (0) target = $region13
    $region12: #{tpu_custom_call.1} parent=1 // pred_region
      _
    $region13: #{tpu_custom_call.1} parent=1 // pred_fallthru
      _
    // Predicated region
    $region14: #{tpu_custom_call.1} parent=1 // pred_check
      _
    $region15: #{tpu_custom_call.1} parent=1 // pred_check_branch
      %19 = sbr.rel (0) target = $region17
    $region16: #{tpu_custom_call.1} parent=1 // pred_region
      _
    $region17: #{tpu_custom_call.1} parent=1 // pred_fallthru
      _
    // Predicated region
    $region18: #{tpu_custom_call.1} parent=1 // pred_check
      _
    $region19: #{tpu_custom_call.1} parent=1 // pred_check_branch
      %21 = sbr.rel (0) target = $region21
    $region20: #{tpu_custom_call.1} parent=1 // pred_region
      _
    $region21: #{tpu_custom_call.1} parent=1 // pred_fallthru
      _
    // Predicated region
    $region22: #{tpu_custom_call.1} parent=1 // pred_check
      _
    $region23: #{tpu_custom_call.1} parent=1 // pred_check_branch
      %23 = sbr.rel (0) target = $region25
    $region24: #{tpu_custom_call.1} parent=1 // pred_region
      _
    $region25: #{tpu_custom_call.1} parent=1 // pred_fallthru
      _
    %v25 = vld [vmem:[%s0] sm:$0xff]
    %v26 = vld [vmem:[%s1] sm:$0xff]
    %v27 = vlaneseq
    %v28 = vand.u32 %v27, 127
    %29 = vset.pattern.permute.xlu0 0
    %30 = vperm.xlu0 %29, %v25
    %v31 = vpop.permute.xlu0 %30
    %vm32 = vcmp.eq.s32.totalorder %v31, %v28
    %v33 = vsel %vm32, 1, 0
    %v34 = vcvt.s32.f32 %v33
    %35 = vset.pattern.permute.xlu0 0
    %36 = vperm.xlu0 %35, %v26
    %v37 = vpop.permute.xlu0 %36
    %vm38 = vcmp.eq.s32.totalorder %v37, %v28
    %v39 = vsel %vm38, 1, 0
    %v40 = vcvt.s32.f32 %v39
    %v41 = vld [vmem:[%s3] sm:$0xff]
    %v42 = vld [vmem:[%s3 + $0x8] sm:$0xff]
    %v43 = vld [vmem:[%s3 + $0x10] sm:$0xff]
    %v44 = vld [vmem:[%s3 + $0x18] sm:$0xff]
    %v45 = vld [vmem:[%s4] sm:$0xff]
    %v46 = vld [vmem:[%s4 + $0x8] sm:$0xff]
    %v47 = vld [vmem:[%s4 + $0x10] sm:$0xff]
    %v48 = vld [vmem:[%s4 + $0x18] sm:$0xff]
    %v49 = vld [vmem:[%s4 + $0x20] sm:$0xff]
    %v50 = vld [vmem:[%s4 + $0x28] sm:$0xff]
    %vm51 = vcmask 392192
    %v53 = vsel %vm51, %v40, 0
    %55 = vmatprep.subr.mxu0 0.0
    %56 = vmatpush1.msra.mxu0 %v45
    %57 = vmatprep.subr.mxu0 0.0
    %58 = vmatpush1.msra.mxu0 %v46
    %59 = vmatprep.subr.mxu0 0.0
    %60 = vmatpush1.msra.mxu0 %v47
    %61 = vmatprep.subr.mxu0 0.0
    %62 = vmatpush1.msra.mxu0 %v48
    %63 = vmatprep.subr.mxu0 0.0
    %64 = vmatpush1.msra.mxu0 %v49
    %65 = vmatprep.subr.mxu0 0.0
    %66 = vmatpush1.msra.mxu0 %v50
    %67 = vmatprep.subr.mxu0 0.0
    %68 = vmatpush1.msra.mxu0 0.0
    %69 = vmatprep.subr.mxu0 0.0
    %70 = vmatpush1.msra.mxu0 0.0
    %71 = vmatprep.subr.mxu0 0.0
    %72 = vmatpush1.msra.mxu0 0.0
    %73 = vmatprep.subr.mxu0 0.0
    %74 = vmatpush1.msra.mxu0 0.0
    %75 = vmatprep.subr.mxu0 0.0
    %76 = vmatpush1.msra.mxu0 0.0
    %77 = vmatprep.subr.mxu0 0.0
    %78 = vmatpush1.msra.mxu0 0.0
    %79 = vmatprep.subr.mxu0 0.0
    %80 = vmatpush1.msra.mxu0 0.0
    %81 = vmatprep.subr.mxu0 0.0
    %82 = vmatpush1.msra.mxu0 0.0
    %83 = vmatprep.subr.mxu0 0.0
    %84 = vmatpush1.msra.mxu0 0.0
    %85 = vmatprep.subr.mxu0 0.0
    %86 = vmatpush1.msra.mxu0 0.0
    %87 = vmatprep.subr.mxu0 0.0
    %88 = vmatpush1.msra.mxu0 0.0
    %89 = vmatprep.subr.mxu0 0.0
    %90 = vmatpush1.msra.mxu0 0.0
    %91 = vmatprep.subr.mxu0 0.0
    %92 = vmatpush1.msra.mxu0 0.0
    %93 = vmatprep.subr.mxu0 0.0
    %94 = vmatpush1.msra.mxu0 0.0
    %95 = vmatprep.subr.mxu0 0.0
    %96 = vmatpush1.msra.mxu0 0.0
    %97 = vmatprep.subr.mxu0 0.0
    %98 = vmatpush1.msra.mxu0 0.0
    %99 = vmatprep.subr.mxu0 0.0
    %100 = vmatpush1.msra.mxu0 0.0
    %101 = vmatprep.subr.mxu0 0.0
    %102 = vmatpush1.msra.mxu0 0.0
    %103 = vmatprep.subr.mxu0 0.0
    %104 = vmatpush1.msra.mxu0 0.0
    %105 = vmatprep.subr.mxu0 0.0
    %106 = vmatpush1.msra.mxu0 0.0
    %107 = vmatprep.subr.mxu0 0.0
    %108 = vmatpush1.msra.mxu0 0.0
    %109 = vmatprep.subr.mxu0 0.0
    %110 = vmatpush1.msra.mxu0 0.0
    %111 = vmatprep.subr.mxu0 0.0
    %112 = vmatpush1.msra.mxu0 0.0
    %113 = vmatprep.subr.mxu0 0.0
    %114 = vmatpush1.msra.mxu0 0.0
    %115 = vmatprep.subr.mxu0 0.0
    %116 = vmatpush1.msra.mxu0 0.0
    %117 = vmatprep.subr.mxu0 0.0
    %118 = vmatpush1.msra.mxu0 0.0
    %119 = vmatprep.mubr.f32.mxu0 0.0
    %120 = vmatmul.mubr.f32.gmra.mrb[0].mxu0 %v53
    %v121 = vpop.f32.mrb[0].mxu0
    %v122 = vadd.f32 0.0, %v121
    %v123 = vpop.f32.mrb[0].mxu0
    %124 = vdwg.mxu0
    %vm125 = vcmask 261120
    %v127 = vsel %vm125, %v34, 0
    %129 = vmatprep.subr.mxu0 0.0
    %130 = vmatpush1.msra.mxu0 %v41
    %131 = vmatprep.subr.mxu0 0.0
    %132 = vmatpush1.msra.mxu0 %v42
    %133 = vmatprep.subr.mxu0 0.0
    %134 = vmatpush1.msra.mxu0 %v43
    %135 = vmatprep.subr.mxu0 0.0
    %136 = vmatpush1.msra.mxu0 %v44
    %137 = vmatprep.subr.mxu0 0.0
    %138 = vmatpush1.msra.mxu0 0.0
    %139 = vmatprep.subr.mxu0 0.0
    %140 = vmatpush1.msra.mxu0 0.0
    %141 = vmatprep.subr.mxu0 0.0
    %142 = vmatpush1.msra.mxu0 0.0
    %143 = vmatprep.subr.mxu0 0.0
    %144 = vmatpush1.msra.mxu0 0.0
    %145 = vmatprep.subr.mxu0 0.0
    %146 = vmatpush1.msra.mxu0 0.0
    %147 = vmatprep.subr.mxu0 0.0
    %148 = vmatpush1.msra.mxu0 0.0
    %149 = vmatprep.subr.mxu0 0.0
    %150 = vmatpush1.msra.mxu0 0.0
    %151 = vmatprep.subr.mxu0 0.0
    %152 = vmatpush1.msra.mxu0 0.0
    %153 = vmatprep.subr.mxu0 0.0
    %154 = vmatpush1.msra.mxu0 0.0
    %155 = vmatprep.subr.mxu0 0.0
    %156 = vmatpush1.msra.mxu0 0.0
    %157 = vmatprep.subr.mxu0 0.0
    %158 = vmatpush1.msra.mxu0 0.0
    %159 = vmatprep.subr.mxu0 0.0
    %160 = vmatpush1.msra.mxu0 0.0
    %161 = vmatprep.subr.mxu0 0.0
    %162 = vmatpush1.msra.mxu0 0.0
    %163 = vmatprep.subr.mxu0 0.0
    %164 = vmatpush1.msra.mxu0 0.0
    %165 = vmatprep.subr.mxu0 0.0
    %166 = vmatpush1.msra.mxu0 0.0
    %167 = vmatprep.subr.mxu0 0.0
    %168 = vmatpush1.msra.mxu0 0.0
    %169 = vmatprep.subr.mxu0 0.0
    %170 = vmatpush1.msra.mxu0 0.0
    %171 = vmatprep.subr.mxu0 0.0
    %172 = vmatpush1.msra.mxu0 0.0
    %173 = vmatprep.subr.mxu0 0.0
    %174 = vmatpush1.msra.mxu0 0.0
    %175 = vmatprep.subr.mxu0 0.0
    %176 = vmatpush1.msra.mxu0 0.0
    %177 = vmatprep.subr.mxu0 0.0
    %178 = vmatpush1.msra.mxu0 0.0
    %179 = vmatprep.subr.mxu0 0.0
    %180 = vmatpush1.msra.mxu0 0.0
    %181 = vmatprep.subr.mxu0 0.0
    %182 = vmatpush1.msra.mxu0 0.0
    %183 = vmatprep.subr.mxu0 0.0
    %184 = vmatpush1.msra.mxu0 0.0
    %185 = vmatprep.subr.mxu0 0.0
    %186 = vmatpush1.msra.mxu0 0.0
    %187 = vmatprep.subr.mxu0 0.0
    %188 = vmatpush1.msra.mxu0 0.0
    %189 = vmatprep.subr.mxu0 0.0
    %190 = vmatpush1.msra.mxu0 0.0
    %191 = vmatprep.subr.mxu0 0.0
    %192 = vmatpush1.msra.mxu0 0.0
    %193 = vmatprep.mubr.f32.mxu0 0.0
    %194 = vmatmul.mubr.f32.gmra.mrb[0].mxu0 %v127
    %v195 = vpop.f32.mrb[0].mxu0
    %v196 = vadd.f32 %v122, %v195
    %v197 = vpop.f32.mrb[0].mxu0
    %198 = vdwg.mxu0
    %v199 = vpack.c.bf16 %v196, %v196
    %v200 = vld [vmem:[%s5] sm:$0xf]
    %v201 = vld [vmem:[%s5 + $0x4] sm:$0xf]
    %v202 = vld [vmem:[%s5 + $0x8] sm:$0xf]
    %v203 = vld [vmem:[%s5 + $0xc] sm:$0xf]
    %v208 = vunpack.c.l.b16 %v200
    %v209 = vunpack.c.l.b16 %v201
    %v210 = vunpack.c.l.b16 %v202
    %v211 = vunpack.c.l.b16 %v203
    %v212 = vpack.c.b16 %v209, %v208
    %v213 = vpack.c.b16 %v211, %v210
    %v217 = vsel %vm125, %v199, 0
    %219 = vmatprep.subr.bf16.mxu0 0
    %220 = vmatpush1.bf16.msra.mxu0 %v212
    %221 = vmatprep.subr.bf16.mxu0 0
    %222 = vmatpush1.bf16.msra.mxu0 %v213
    %223 = vmatprep.subr.bf16.mxu0 0
    %224 = vmatpush1.bf16.msra.mxu0 0
    %225 = vmatprep.subr.bf16.mxu0 0
    %226 = vmatpush1.bf16.msra.mxu0 0
    %227 = vmatprep.subr.bf16.mxu0 0
    %228 = vmatpush1.bf16.msra.mxu0 0
    %229 = vmatprep.subr.bf16.mxu0 0
    %230 = vmatpush1.bf16.msra.mxu0 0
    %231 = vmatprep.subr.bf16.mxu0 0
    %232 = vmatpush1.bf16.msra.mxu0 0
    %233 = vmatprep.subr.bf16.mxu0 0
    %234 = vmatpush1.bf16.msra.mxu0 0
    %235 = vmatprep.subr.bf16.mxu0 0
    %236 = vmatpush1.bf16.msra.mxu0 0
    %237 = vmatprep.subr.bf16.mxu0 0
    %238 = vmatpush1.bf16.msra.mxu0 0
    %239 = vmatprep.subr.bf16.mxu0 0
    %240 = vmatpush1.bf16.msra.mxu0 0
    %241 = vmatprep.subr.bf16.mxu0 0
    %242 = vmatpush1.bf16.msra.mxu0 0
    %243 = vmatprep.subr.bf16.mxu0 0
    %244 = vmatpush1.bf16.msra.mxu0 0
    %245 = vmatprep.subr.bf16.mxu0 0
    %246 = vmatpush1.bf16.msra.mxu0 0
    %247 = vmatprep.subr.bf16.mxu0 0
    %248 = vmatpush1.bf16.msra.mxu0 0
    %249 = vmatprep.subr.bf16.mxu0 0
    %250 = vmatpush1.bf16.msra.mxu0 0
    %251 = vmatprep.mubr.bf16.mxu0 0
    %252 = vmatmul.mubr.bf16.gmra.mrb[0].mxu0 %v217
    %v253 = vpop.f32.mrb[0].mxu0
    %v254 = vadd.f32 0.0, %v253
    %v255 = vpop.f32.mrb[0].mxu0
    %v256 = vpop.f32.mrb[0].mxu0
    %v257 = vpop.f32.mrb[0].mxu0
    %258 = vdwg.mxu0
    %v259 = vld [vmem:[%s2] sm:$0xff]
    %v260 = vlaneseq
    %v261 = vshrl.u32 %v260, 7
    %v262 = vsub.s32 0, %v261
    %v263 = vrot.slane %v259, %v262
    %265 = vbcast.lane.b32.xlu0 %v263, 256
    %v266 = vpop.permute.xlu0 %265
    %s268 = sor.u32 256, 8
    %269 = vbcast.lane.b32.xlu0 %v263, %s268
    %v270 = vpop.permute.xlu0 %269
    %s272 = sor.u32 256, 16
    %273 = vbcast.lane.b32.xlu0 %v263, %s272
    %v274 = vpop.permute.xlu0 %273
    %s276 = sor.u32 256, 24
    %277 = vbcast.lane.b32.xlu0 %v263, %s276
    %v278 = vpop.permute.xlu0 %277
    %s280 = sor.u32 256, 32
    %281 = vbcast.lane.b32.xlu0 %v263, %s280
    %v282 = vpop.permute.xlu0 %281
    %s284 = sor.u32 256, 40
    %285 = vbcast.lane.b32.xlu0 %v263, %s284
    %v286 = vpop.permute.xlu0 %285
    %s288 = sor.u32 256, 48
    %289 = vbcast.lane.b32.xlu0 %v263, %s288
    %v290 = vpop.permute.xlu0 %289
    %s292 = sor.u32 256, 56
    %293 = vbcast.lane.b32.xlu0 %v263, %s292
    %v294 = vpop.permute.xlu0 %293
    %s296 = sor.u32 256, 64
    %297 = vbcast.lane.b32.xlu0 %v263, %s296
    %v298 = vpop.permute.xlu0 %297
    %s300 = sor.u32 256, 72
    %301 = vbcast.lane.b32.xlu0 %v263, %s300
    %v302 = vpop.permute.xlu0 %301
    %s304 = sor.u32 256, 80
    %305 = vbcast.lane.b32.xlu0 %v263, %s304
    %v306 = vpop.permute.xlu0 %305
    %s308 = sor.u32 256, 88
    %309 = vbcast.lane.b32.xlu0 %v263, %s308
    %v310 = vpop.permute.xlu0 %309
    %s312 = sor.u32 256, 96
    %313 = vbcast.lane.b32.xlu0 %v263, %s312
    %v314 = vpop.permute.xlu0 %313
    %s316 = sor.u32 256, 104
    %317 = vbcast.lane.b32.xlu0 %v263, %s316
    %v318 = vpop.permute.xlu0 %317
    %s320 = sor.u32 256, 112
    %321 = vbcast.lane.b32.xlu0 %v263, %s320
    %v322 = vpop.permute.xlu0 %321
    %s324 = sor.u32 256, 120
    %325 = vbcast.lane.b32.xlu0 %v263, %s324
    %v326 = vpop.permute.xlu0 %325
    %v327 = vlaneseq
    %v328 = vshrl.u32 %v327, 7
    %v329 = vsub.s32 1, %v328
    %v330 = vrot.slane %v259, %v329
    %332 = vbcast.lane.b32.xlu0 %v330, 256
    %v333 = vpop.permute.xlu0 %332
    %s335 = sor.u32 256, 8
    %336 = vbcast.lane.b32.xlu0 %v330, %s335
    %v337 = vpop.permute.xlu0 %336
    %s339 = sor.u32 256, 16
    %340 = vbcast.lane.b32.xlu0 %v330, %s339
    %v341 = vpop.permute.xlu0 %340
    %s343 = sor.u32 256, 24
    %344 = vbcast.lane.b32.xlu0 %v330, %s343
    %v345 = vpop.permute.xlu0 %344
    %s347 = sor.u32 256, 32
    %348 = vbcast.lane.b32.xlu0 %v330, %s347
    %v349 = vpop.permute.xlu0 %348
    %s351 = sor.u32 256, 40
    %352 = vbcast.lane.b32.xlu0 %v330, %s351
    %v353 = vpop.permute.xlu0 %352
    %s355 = sor.u32 256, 48
    %356 = vbcast.lane.b32.xlu0 %v330, %s355
    %v357 = vpop.permute.xlu0 %356
    %s359 = sor.u32 256, 56
    %360 = vbcast.lane.b32.xlu0 %v330, %s359
    %v361 = vpop.permute.xlu0 %360
    %s363 = sor.u32 256, 64
    %364 = vbcast.lane.b32.xlu0 %v330, %s363
    %v365 = vpop.permute.xlu0 %364
    %s367 = sor.u32 256, 72
    %368 = vbcast.lane.b32.xlu0 %v330, %s367
    %v369 = vpop.permute.xlu0 %368
    %s371 = sor.u32 256, 80
    %372 = vbcast.lane.b32.xlu0 %v330, %s371
    %v373 = vpop.permute.xlu0 %372
    %s375 = sor.u32 256, 88
    %376 = vbcast.lane.b32.xlu0 %v330, %s375
    %v377 = vpop.permute.xlu0 %376
    %s379 = sor.u32 256, 96
    %380 = vbcast.lane.b32.xlu0 %v330, %s379
    %v381 = vpop.permute.xlu0 %380
    %s383 = sor.u32 256, 104
    %384 = vbcast.lane.b32.xlu0 %v330, %s383
    %v385 = vpop.permute.xlu0 %384
    %s387 = sor.u32 256, 112
    %388 = vbcast.lane.b32.xlu0 %v330, %s387
    %v389 = vpop.permute.xlu0 %388
    %s391 = sor.u32 256, 120
    %392 = vbcast.lane.b32.xlu0 %v330, %s391
    %v393 = vpop.permute.xlu0 %392
    %v394 = vlaneseq
    %v395 = vshrl.u32 %v394, 7
    %v396 = vsub.s32 2, %v395
    %v397 = vrot.slane %v259, %v396
    %399 = vbcast.lane.b32.xlu0 %v397, 256
    %v400 = vpop.permute.xlu0 %399
    %s402 = sor.u32 256, 8
    %403 = vbcast.lane.b32.xlu0 %v397, %s402
    %v404 = vpop.permute.xlu0 %403
    %s406 = sor.u32 256, 16
    %407 = vbcast.lane.b32.xlu0 %v397, %s406
    %v408 = vpop.permute.xlu0 %407
    %s410 = sor.u32 256, 24
    %411 = vbcast.lane.b32.xlu0 %v397, %s410
    %v412 = vpop.permute.xlu0 %411
    %s414 = sor.u32 256, 32
    %415 = vbcast.lane.b32.xlu0 %v397, %s414
    %v416 = vpop.permute.xlu0 %415
    %s418 = sor.u32 256, 40
    %419 = vbcast.lane.b32.xlu0 %v397, %s418
    %v420 = vpop.permute.xlu0 %419
    %s422 = sor.u32 256, 48
    %423 = vbcast.lane.b32.xlu0 %v397, %s422
    %v424 = vpop.permute.xlu0 %423
    %s426 = sor.u32 256, 56
    %427 = vbcast.lane.b32.xlu0 %v397, %s426
    %v428 = vpop.permute.xlu0 %427
    %s430 = sor.u32 256, 64
    %431 = vbcast.lane.b32.xlu0 %v397, %s430
    %v432 = vpop.permute.xlu0 %431
    %s434 = sor.u32 256, 72
    %435 = vbcast.lane.b32.xlu0 %v397, %s434
    %v436 = vpop.permute.xlu0 %435
    %s438 = sor.u32 256, 80
    %439 = vbcast.lane.b32.xlu0 %v397, %s438
    %v440 = vpop.permute.xlu0 %439
    %s442 = sor.u32 256, 88
    %443 = vbcast.lane.b32.xlu0 %v397, %s442
    %v444 = vpop.permute.xlu0 %443
    %s446 = sor.u32 256, 96
    %447 = vbcast.lane.b32.xlu0 %v397, %s446
    %v448 = vpop.permute.xlu0 %447
    %s450 = sor.u32 256, 104
    %451 = vbcast.lane.b32.xlu0 %v397, %s450
    %v452 = vpop.permute.xlu0 %451
    %s454 = sor.u32 256, 112
    %455 = vbcast.lane.b32.xlu0 %v397, %s454
    %v456 = vpop.permute.xlu0 %455
    %s458 = sor.u32 256, 120
    %459 = vbcast.lane.b32.xlu0 %v397, %s458
    %v460 = vpop.permute.xlu0 %459
    %v461 = vlaneseq
    %v462 = vshrl.u32 %v461, 7
    %v463 = vsub.s32 3, %v462
    %v464 = vrot.slane %v259, %v463
    %466 = vbcast.lane.b32.xlu0 %v464, 256
    %v467 = vpop.permute.xlu0 %466
    %s469 = sor.u32 256, 8
    %470 = vbcast.lane.b32.xlu0 %v464, %s469
    %v471 = vpop.permute.xlu0 %470
    %s473 = sor.u32 256, 16
    %474 = vbcast.lane.b32.xlu0 %v464, %s473
    %v475 = vpop.permute.xlu0 %474
    %s477 = sor.u32 256, 24
    %478 = vbcast.lane.b32.xlu0 %v464, %s477
    %v479 = vpop.permute.xlu0 %478
    %s481 = sor.u32 256, 32
    %482 = vbcast.lane.b32.xlu0 %v464, %s481
    %v483 = vpop.permute.xlu0 %482
    %s485 = sor.u32 256, 40
    %486 = vbcast.lane.b32.xlu0 %v464, %s485
    %v487 = vpop.permute.xlu0 %486
    %s489 = sor.u32 256, 48
    %490 = vbcast.lane.b32.xlu0 %v464, %s489
    %v491 = vpop.permute.xlu0 %490
    %s493 = sor.u32 256, 56
    %494 = vbcast.lane.b32.xlu0 %v464, %s493
    %v495 = vpop.permute.xlu0 %494
    %s497 = sor.u32 256, 64
    %498 = vbcast.lane.b32.xlu0 %v464, %s497
    %v499 = vpop.permute.xlu0 %498
    %s501 = sor.u32 256, 72
    %502 = vbcast.lane.b32.xlu0 %v464, %s501
    %v503 = vpop.permute.xlu0 %502
    %s505 = sor.u32 256, 80
    %506 = vbcast.lane.b32.xlu0 %v464, %s505
    %v507 = vpop.permute.xlu0 %506
    %s509 = sor.u32 256, 88
    %510 = vbcast.lane.b32.xlu0 %v464, %s509
    %v511 = vpop.permute.xlu0 %510
    %s513 = sor.u32 256, 96
    %514 = vbcast.lane.b32.xlu0 %v464, %s513
    %v515 = vpop.permute.xlu0 %514
    %s517 = sor.u32 256, 104
    %518 = vbcast.lane.b32.xlu0 %v464, %s517
    %v519 = vpop.permute.xlu0 %518
    %s521 = sor.u32 256, 112
    %522 = vbcast.lane.b32.xlu0 %v464, %s521
    %v523 = vpop.permute.xlu0 %522
    %s525 = sor.u32 256, 120
    %526 = vbcast.lane.b32.xlu0 %v464, %s525
    %v527 = vpop.permute.xlu0 %526
    %v528 = vlaneseq
    %v529 = vshrl.u32 %v528, 7
    %v530 = vsub.s32 4, %v529
    %v531 = vrot.slane %v259, %v530
    %533 = vbcast.lane.b32.xlu0 %v531, 256
    %v534 = vpop.permute.xlu0 %533
    %s536 = sor.u32 256, 8
    %537 = vbcast.lane.b32.xlu0 %v531, %s536
    %v538 = vpop.permute.xlu0 %537
    %s540 = sor.u32 256, 16
    %541 = vbcast.lane.b32.xlu0 %v531, %s540
    %v542 = vpop.permute.xlu0 %541
    %s544 = sor.u32 256, 24
    %545 = vbcast.lane.b32.xlu0 %v531, %s544
    %v546 = vpop.permute.xlu0 %545
    %s548 = sor.u32 256, 32
    %549 = vbcast.lane.b32.xlu0 %v531, %s548
    %v550 = vpop.permute.xlu0 %549
    %s552 = sor.u32 256, 40
    %553 = vbcast.lane.b32.xlu0 %v531, %s552
    %v554 = vpop.permute.xlu0 %553
    %s556 = sor.u32 256, 48
    %557 = vbcast.lane.b32.xlu0 %v531, %s556
    %v558 = vpop.permute.xlu0 %557
    %s560 = sor.u32 256, 56
    %561 = vbcast.lane.b32.xlu0 %v531, %s560
    %v562 = vpop.permute.xlu0 %561
    %s564 = sor.u32 256, 64
    %565 = vbcast.lane.b32.xlu0 %v531, %s564
    %v566 = vpop.permute.xlu0 %565
    %s568 = sor.u32 256, 72
    %569 = vbcast.lane.b32.xlu0 %v531, %s568
    %v570 = vpop.permute.xlu0 %569
    %s572 = sor.u32 256, 80
    %573 = vbcast.lane.b32.xlu0 %v531, %s572
    %v574 = vpop.permute.xlu0 %573
    %s576 = sor.u32 256, 88
    %577 = vbcast.lane.b32.xlu0 %v531, %s576
    %v578 = vpop.permute.xlu0 %577
    %s580 = sor.u32 256, 96
    %581 = vbcast.lane.b32.xlu0 %v531, %s580
    %v582 = vpop.permute.xlu0 %581
    %s584 = sor.u32 256, 104
    %585 = vbcast.lane.b32.xlu0 %v531, %s584
    %v586 = vpop.permute.xlu0 %585
    %s588 = sor.u32 256, 112
    %589 = vbcast.lane.b32.xlu0 %v531, %s588
    %v590 = vpop.permute.xlu0 %589
    %s592 = sor.u32 256, 120
    %593 = vbcast.lane.b32.xlu0 %v531, %s592
    %v594 = vpop.permute.xlu0 %593
    %v595 = vlaneseq
    %v596 = vshrl.u32 %v595, 7
    %v597 = vsub.s32 5, %v596
    %v598 = vrot.slane %v259, %v597
    %600 = vbcast.lane.b32.xlu0 %v598, 256
    %v601 = vpop.permute.xlu0 %600
    %s603 = sor.u32 256, 8
    %604 = vbcast.lane.b32.xlu0 %v598, %s603
    %v605 = vpop.permute.xlu0 %604
    %s607 = sor.u32 256, 16
    %608 = vbcast.lane.b32.xlu0 %v598, %s607
    %v609 = vpop.permute.xlu0 %608
    %s611 = sor.u32 256, 24
    %612 = vbcast.lane.b32.xlu0 %v598, %s611
    %v613 = vpop.permute.xlu0 %612
    %s615 = sor.u32 256, 32
    %616 = vbcast.lane.b32.xlu0 %v598, %s615
    %v617 = vpop.permute.xlu0 %616
    %s619 = sor.u32 256, 40
    %620 = vbcast.lane.b32.xlu0 %v598, %s619
    %v621 = vpop.permute.xlu0 %620
    %s623 = sor.u32 256, 48
    %624 = vbcast.lane.b32.xlu0 %v598, %s623
    %v625 = vpop.permute.xlu0 %624
    %s627 = sor.u32 256, 56
    %628 = vbcast.lane.b32.xlu0 %v598, %s627
    %v629 = vpop.permute.xlu0 %628
    %s631 = sor.u32 256, 64
    %632 = vbcast.lane.b32.xlu0 %v598, %s631
    %v633 = vpop.permute.xlu0 %632
    %s635 = sor.u32 256, 72
    %636 = vbcast.lane.b32.xlu0 %v598, %s635
    %v637 = vpop.permute.xlu0 %636
    %s639 = sor.u32 256, 80
    %640 = vbcast.lane.b32.xlu0 %v598, %s639
    %v641 = vpop.permute.xlu0 %640
    %s643 = sor.u32 256, 88
    %644 = vbcast.lane.b32.xlu0 %v598, %s643
    %v645 = vpop.permute.xlu0 %644
    %s647 = sor.u32 256, 96
    %648 = vbcast.lane.b32.xlu0 %v598, %s647
    %v649 = vpop.permute.xlu0 %648
    %s651 = sor.u32 256, 104
    %652 = vbcast.lane.b32.xlu0 %v598, %s651
    %v653 = vpop.permute.xlu0 %652
    %s655 = sor.u32 256, 112
    %656 = vbcast.lane.b32.xlu0 %v598, %s655
    %v657 = vpop.permute.xlu0 %656
    %s659 = sor.u32 256, 120
    %660 = vbcast.lane.b32.xlu0 %v598, %s659
    %v661 = vpop.permute.xlu0 %660
    %v662 = vlaneseq
    %v663 = vshrl.u32 %v662, 7
    %v664 = vsub.s32 6, %v663
    %v665 = vrot.slane %v259, %v664
    %667 = vbcast.lane.b32.xlu0 %v665, 256
    %v668 = vpop.permute.xlu0 %667
    %s670 = sor.u32 256, 8
    %671 = vbcast.lane.b32.xlu0 %v665, %s670
    %v672 = vpop.permute.xlu0 %671
    %s674 = sor.u32 256, 16
    %675 = vbcast.lane.b32.xlu0 %v665, %s674
    %v676 = vpop.permute.xlu0 %675
    %s678 = sor.u32 256, 24
    %679 = vbcast.lane.b32.xlu0 %v665, %s678
    %v680 = vpop.permute.xlu0 %679
    %s682 = sor.u32 256, 32
    %683 = vbcast.lane.b32.xlu0 %v665, %s682
    %v684 = vpop.permute.xlu0 %683
    %s686 = sor.u32 256, 40
    %687 = vbcast.lane.b32.xlu0 %v665, %s686
    %v688 = vpop.permute.xlu0 %687
    %s690 = sor.u32 256, 48
    %691 = vbcast.lane.b32.xlu0 %v665, %s690
    %v692 = vpop.permute.xlu0 %691
    %s694 = sor.u32 256, 56
    %695 = vbcast.lane.b32.xlu0 %v665, %s694
    %v696 = vpop.permute.xlu0 %695
    %s698 = sor.u32 256, 64
    %699 = vbcast.lane.b32.xlu0 %v665, %s698
    %v700 = vpop.permute.xlu0 %699
    %s702 = sor.u32 256, 72
    %703 = vbcast.lane.b32.xlu0 %v665, %s702
    %v704 = vpop.permute.xlu0 %703
    %s706 = sor.u32 256, 80
    %707 = vbcast.lane.b32.xlu0 %v665, %s706
    %v708 = vpop.permute.xlu0 %707
    %s710 = sor.u32 256, 88
    %711 = vbcast.lane.b32.xlu0 %v665, %s710
    %v712 = vpop.permute.xlu0 %711
    %s714 = sor.u32 256, 96
    %715 = vbcast.lane.b32.xlu0 %v665, %s714
    %v716 = vpop.permute.xlu0 %715
    %s718 = sor.u32 256, 104
    %719 = vbcast.lane.b32.xlu0 %v665, %s718
    %v720 = vpop.permute.xlu0 %719
    %s722 = sor.u32 256, 112
    %723 = vbcast.lane.b32.xlu0 %v665, %s722
    %v724 = vpop.permute.xlu0 %723
    %s726 = sor.u32 256, 120
    %727 = vbcast.lane.b32.xlu0 %v665, %s726
    %v728 = vpop.permute.xlu0 %727
    %v729 = vlaneseq
    %v730 = vshrl.u32 %v729, 7
    %v731 = vsub.s32 7, %v730
    %v732 = vrot.slane %v259, %v731
    %734 = vbcast.lane.b32.xlu0 %v732, 256
    %v735 = vpop.permute.xlu0 %734
    %s737 = sor.u32 256, 8
    %738 = vbcast.lane.b32.xlu0 %v732, %s737
    %v739 = vpop.permute.xlu0 %738
    %s741 = sor.u32 256, 16
    %742 = vbcast.lane.b32.xlu0 %v732, %s741
    %v743 = vpop.permute.xlu0 %742
    %s745 = sor.u32 256, 24
    %746 = vbcast.lane.b32.xlu0 %v732, %s745
    %v747 = vpop.permute.xlu0 %746
    %s749 = sor.u32 256, 32
    %750 = vbcast.lane.b32.xlu0 %v732, %s749
    %v751 = vpop.permute.xlu0 %750
    %s753 = sor.u32 256, 40
    %754 = vbcast.lane.b32.xlu0 %v732, %s753
    %v755 = vpop.permute.xlu0 %754
    %s757 = sor.u32 256, 48
    %758 = vbcast.lane.b32.xlu0 %v732, %s757
    %v759 = vpop.permute.xlu0 %758
    %s761 = sor.u32 256, 56
    %762 = vbcast.lane.b32.xlu0 %v732, %s761
    %v763 = vpop.permute.xlu0 %762
    %s765 = sor.u32 256, 64
    %766 = vbcast.lane.b32.xlu0 %v732, %s765
    %v767 = vpop.permute.xlu0 %766
    %s769 = sor.u32 256, 72
    %770 = vbcast.lane.b32.xlu0 %v732, %s769
    %v771 = vpop.permute.xlu0 %770
    %s773 = sor.u32 256, 80
    %774 = vbcast.lane.b32.xlu0 %v732, %s773
    %v775 = vpop.permute.xlu0 %774
    %s777 = sor.u32 256, 88
    %778 = vbcast.lane.b32.xlu0 %v732, %s777
    %v779 = vpop.permute.xlu0 %778
    %s781 = sor.u32 256, 96
    %782 = vbcast.lane.b32.xlu0 %v732, %s781
    %v783 = vpop.permute.xlu0 %782
    %s785 = sor.u32 256, 104
    %786 = vbcast.lane.b32.xlu0 %v732, %s785
    %v787 = vpop.permute.xlu0 %786
    %s789 = sor.u32 256, 112
    %790 = vbcast.lane.b32.xlu0 %v732, %s789
    %v791 = vpop.permute.xlu0 %790
    %s793 = sor.u32 256, 120
    %794 = vbcast.lane.b32.xlu0 %v732, %s793
    %v795 = vpop.permute.xlu0 %794
    %vm796 = vcmp.eq.s32.totalorder %v266, %v28
    %vm797 = vcmp.eq.s32.totalorder %v270, %v28
    %vm798 = vcmp.eq.s32.totalorder %v274, %v28
    %vm799 = vcmp.eq.s32.totalorder %v278, %v28
    %vm800 = vcmp.eq.s32.totalorder %v282, %v28
    %vm801 = vcmp.eq.s32.totalorder %v286, %v28
    %vm802 = vcmp.eq.s32.totalorder %v290, %v28
    %vm803 = vcmp.eq.s32.totalorder %v294, %v28
    %vm804 = vcmp.eq.s32.totalorder %v298, %v28
    %vm805 = vcmp.eq.s32.totalorder %v302, %v28
    %vm806 = vcmp.eq.s32.totalorder %v306, %v28
    %vm807 = vcmp.eq.s32.totalorder %v310, %v28
    %vm808 = vcmp.eq.s32.totalorder %v314, %v28
    %vm809 = vcmp.eq.s32.totalorder %v318, %v28
    %vm810 = vcmp.eq.s32.totalorder %v322, %v28
    %vm811 = vcmp.eq.s32.totalorder %v326, %v28
    %vm812 = vcmp.eq.s32.totalorder %v333, %v28
    %vm813 = vcmp.eq.s32.totalorder %v337, %v28
    %vm814 = vcmp.eq.s32.totalorder %v341, %v28
    %vm815 = vcmp.eq.s32.totalorder %v345, %v28
    %vm816 = vcmp.eq.s32.totalorder %v349, %v28
    %vm817 = vcmp.eq.s32.totalorder %v353, %v28
    %vm818 = vcmp.eq.s32.totalorder %v357, %v28
    %vm819 = vcmp.eq.s32.totalorder %v361, %v28
    %vm820 = vcmp.eq.s32.totalorder %v365, %v28
    %vm821 = vcmp.eq.s32.totalorder %v369, %v28
    %vm822 = vcmp.eq.s32.totalorder %v373, %v28
    %vm823 = vcmp.eq.s32.totalorder %v377, %v28
    %vm824 = vcmp.eq.s32.totalorder %v381, %v28
    %vm825 = vcmp.eq.s32.totalorder %v385, %v28
    %vm826 = vcmp.eq.s32.totalorder %v389, %v28
    %vm827 = vcmp.eq.s32.totalorder %v393, %v28
    %vm828 = vcmp.eq.s32.totalorder %v400, %v28
    %vm829 = vcmp.eq.s32.totalorder %v404, %v28
    %vm830 = vcmp.eq.s32.totalorder %v408, %v28
    %vm831 = vcmp.eq.s32.totalorder %v412, %v28
    %vm832 = vcmp.eq.s32.totalorder %v416, %v28
    %vm833 = vcmp.eq.s32.totalorder %v420, %v28
    %vm834 = vcmp.eq.s32.totalorder %v424, %v28
    %vm835 = vcmp.eq.s32.totalorder %v428, %v28
    %vm836 = vcmp.eq.s32.totalorder %v432, %v28
    %vm837 = vcmp.eq.s32.totalorder %v436, %v28
    %vm838 = vcmp.eq.s32.totalorder %v440, %v28
    %vm839 = vcmp.eq.s32.totalorder %v444, %v28
    %vm840 = vcmp.eq.s32.totalorder %v448, %v28
    %vm841 = vcmp.eq.s32.totalorder %v452, %v28
    %vm842 = vcmp.eq.s32.totalorder %v456, %v28
    %vm843 = vcmp.eq.s32.totalorder %v460, %v28
    %vm844 = vcmp.eq.s32.totalorder %v467, %v28
    %vm845 = vcmp.eq.s32.totalorder %v471, %v28
    %vm846 = vcmp.eq.s32.totalorder %v475, %v28
    %vm847 = vcmp.eq.s32.totalorder %v479, %v28
    %vm848 = vcmp.eq.s32.totalorder %v483, %v28
    %vm849 = vcmp.eq.s32.totalorder %v487, %v28
    %vm850 = vcmp.eq.s32.totalorder %v491, %v28
    %vm851 = vcmp.eq.s32.totalorder %v495, %v28
    %vm852 = vcmp.eq.s32.totalorder %v499, %v28
    %vm853 = vcmp.eq.s32.totalorder %v503, %v28
    %vm854 = vcmp.eq.s32.totalorder %v507, %v28
    %vm855 = vcmp.eq.s32.totalorder %v511, %v28
    %vm856 = vcmp.eq.s32.totalorder %v515, %v28
    %vm857 = vcmp.eq.s32.totalorder %v519, %v28
    %vm858 = vcmp.eq.s32.totalorder %v523, %v28
    %vm859 = vcmp.eq.s32.totalorder %v527, %v28
    %vm860 = vcmp.eq.s32.totalorder %v534, %v28
    %vm861 = vcmp.eq.s32.totalorder %v538, %v28
    %vm862 = vcmp.eq.s32.totalorder %v542, %v28
    %vm863 = vcmp.eq.s32.totalorder %v546, %v28
    %vm864 = vcmp.eq.s32.totalorder %v550, %v28
    %vm865 = vcmp.eq.s32.totalorder %v554, %v28
    %vm866 = vcmp.eq.s32.totalorder %v558, %v28
    %vm867 = vcmp.eq.s32.totalorder %v562, %v28
    %vm868 = vcmp.eq.s32.totalorder %v566, %v28
    %vm869 = vcmp.eq.s32.totalorder %v570, %v28
    %vm870 = vcmp.eq.s32.totalorder %v574, %v28
    %vm871 = vcmp.eq.s32.totalorder %v578, %v28
    %vm872 = vcmp.eq.s32.totalorder %v582, %v28
    %vm873 = vcmp.eq.s32.totalorder %v586, %v28
    %vm874 = vcmp.eq.s32.totalorder %v590, %v28
    %vm875 = vcmp.eq.s32.totalorder %v594, %v28
    %vm876 = vcmp.eq.s32.totalorder %v601, %v28
    %vm877 = vcmp.eq.s32.totalorder %v605, %v28
    %vm878 = vcmp.eq.s32.totalorder %v609, %v28
    %vm879 = vcmp.eq.s32.totalorder %v613, %v28
    %vm880 = vcmp.eq.s32.totalorder %v617, %v28
    %vm881 = vcmp.eq.s32.totalorder %v621, %v28
    %vm882 = vcmp.eq.s32.totalorder %v625, %v28
    %vm883 = vcmp.eq.s32.totalorder %v629, %v28
    %vm884 = vcmp.eq.s32.totalorder %v633, %v28
    %vm885 = vcmp.eq.s32.totalorder %v637, %v28
    %vm886 = vcmp.eq.s32.totalorder %v641, %v28
    %vm887 = vcmp.eq.s32.totalorder %v645, %v28
    %vm888 = vcmp.eq.s32.totalorder %v649, %v28
    %vm889 = vcmp.eq.s32.totalorder %v653, %v28
    %vm890 = vcmp.eq.s32.totalorder %v657, %v28
    %vm891 = vcmp.eq.s32.totalorder %v661, %v28
    %vm892 = vcmp.eq.s32.totalorder %v668, %v28
    %vm893 = vcmp.eq.s32.totalorder %v672, %v28
    %vm894 = vcmp.eq.s32.totalorder %v676, %v28
    %vm895 = vcmp.eq.s32.totalorder %v680, %v28
    %vm896 = vcmp.eq.s32.totalorder %v684, %v28
    %vm897 = vcmp.eq.s32.totalorder %v688, %v28
    %vm898 = vcmp.eq.s32.totalorder %v692, %v28
    %vm899 = vcmp.eq.s32.totalorder %v696, %v28
    %vm900 = vcmp.eq.s32.totalorder %v700, %v28
    %vm901 = vcmp.eq.s32.totalorder %v704, %v28
    %vm902 = vcmp.eq.s32.totalorder %v708, %v28
    %vm903 = vcmp.eq.s32.totalorder %v712, %v28
    %vm904 = vcmp.eq.s32.totalorder %v716, %v28
    %vm905 = vcmp.eq.s32.totalorder %v720, %v28
    %vm906 = vcmp.eq.s32.totalorder %v724, %v28
    %vm907 = vcmp.eq.s32.totalorder %v728, %v28
    %vm908 = vcmp.eq.s32.totalorder %v735, %v28
    %vm909 = vcmp.eq.s32.totalorder %v739, %v28
    %vm910 = vcmp.eq.s32.totalorder %v743, %v28
    %vm911 = vcmp.eq.s32.totalorder %v747, %v28
    %vm912 = vcmp.eq.s32.totalorder %v751, %v28
    %vm913 = vcmp.eq.s32.totalorder %v755, %v28
    %vm914 = vcmp.eq.s32.totalorder %v759, %v28
    %vm915 = vcmp.eq.s32.totalorder %v763, %v28
    %vm916 = vcmp.eq.s32.totalorder %v767, %v28
    %vm917 = vcmp.eq.s32.totalorder %v771, %v28
    %vm918 = vcmp.eq.s32.totalorder %v775, %v28
    %vm919 = vcmp.eq.s32.totalorder %v779, %v28
    %vm920 = vcmp.eq.s32.totalorder %v783, %v28
    %vm921 = vcmp.eq.s32.totalorder %v787, %v28
    %vm922 = vcmp.eq.s32.totalorder %v791, %v28
    %vm923 = vcmp.eq.s32.totalorder %v795, %v28
    %v924 = vsel %vm796, 1, 0
    %v925 = vsel %vm797, 1, 0
    %v926 = vsel %vm798, 1, 0
    %v927 = vsel %vm799, 1, 0
    %v928 = vsel %vm800, 1, 0
    %v929 = vsel %vm801, 1, 0
    %v930 = vsel %vm802, 1, 0
    %v931 = vsel %vm803, 1, 0
    %v932 = vsel %vm804, 1, 0
    %v933 = vsel %vm805, 1, 0
    %v934 = vsel %vm806, 1, 0
    %v935 = vsel %vm807, 1, 0
    %v936 = vsel %vm808, 1, 0
    %v937 = vsel %vm809, 1, 0
    %v938 = vsel %vm810, 1, 0
    %v939 = vsel %vm811, 1, 0
    %v940 = vsel %vm812, 1, 0
    %v941 = vsel %vm813, 1, 0
    %v942 = vsel %vm814, 1, 0
    %v943 = vsel %vm815, 1, 0
    %v944 = vsel %vm816, 1, 0
    %v945 = vsel %vm817, 1, 0
    %v946 = vsel %vm818, 1, 0
    %v947 = vsel %vm819, 1, 0
    %v948 = vsel %vm820, 1, 0
    %v949 = vsel %vm821, 1, 0
    %v950 = vsel %vm822, 1, 0
    %v951 = vsel %vm823, 1, 0
    %v952 = vsel %vm824, 1, 0
    %v953 = vsel %vm825, 1, 0
    %v954 = vsel %vm826, 1, 0
    %v955 = vsel %vm827, 1, 0
    %v956 = vsel %vm828, 1, 0
    %v957 = vsel %vm829, 1, 0
    %v958 = vsel %vm830, 1, 0
    %v959 = vsel %vm831, 1, 0
    %v960 = vsel %vm832, 1, 0
    %v961 = vsel %vm833, 1, 0
    %v962 = vsel %vm834, 1, 0
    %v963 = vsel %vm835, 1, 0
    %v964 = vsel %vm836, 1, 0
    %v965 = vsel %vm837, 1, 0
    %v966 = vsel %vm838, 1, 0
    %v967 = vsel %vm839, 1, 0
    %v968 = vsel %vm840, 1, 0
    %v969 = vsel %vm841, 1, 0
    %v970 = vsel %vm842, 1, 0
    %v971 = vsel %vm843, 1, 0
    %v972 = vsel %vm844, 1, 0
    %v973 = vsel %vm845, 1, 0
    %v974 = vsel %vm846, 1, 0
    %v975 = vsel %vm847, 1, 0
    %v976 = vsel %vm848, 1, 0
    %v977 = vsel %vm849, 1, 0
    %v978 = vsel %vm850, 1, 0
    %v979 = vsel %vm851, 1, 0
    %v980 = vsel %vm852, 1, 0
    %v981 = vsel %vm853, 1, 0
    %v982 = vsel %vm854, 1, 0
    %v983 = vsel %vm855, 1, 0
    %v984 = vsel %vm856, 1, 0
    %v985 = vsel %vm857, 1, 0
    %v986 = vsel %vm858, 1, 0
    %v987 = vsel %vm859, 1, 0
    %v988 = vsel %vm860, 1, 0
    %v989 = vsel %vm861, 1, 0
    %v990 = vsel %vm862, 1, 0
    %v991 = vsel %vm863, 1, 0
    %v992 = vsel %vm864, 1, 0
    %v993 = vsel %vm865, 1, 0
    %v994 = vsel %vm866, 1, 0
    %v995 = vsel %vm867, 1, 0
    %v996 = vsel %vm868, 1, 0
    %v997 = vsel %vm869, 1, 0
    %v998 = vsel %vm870, 1, 0
    %v999 = vsel %vm871, 1, 0
    %v1000 = vsel %vm872, 1, 0
    %v1001 = vsel %vm873, 1, 0
    %v1002 = vsel %vm874, 1, 0
    %v1003 = vsel %vm875, 1, 0
    %v1004 = vsel %vm876, 1, 0
    %v1005 = vsel %vm877, 1, 0
    %v1006 = vsel %vm878, 1, 0
    %v1007 = vsel %vm879, 1, 0
    %v1008 = vsel %vm880, 1, 0
    %v1009 = vsel %vm881, 1, 0
    %v1010 = vsel %vm882, 1, 0
    %v1011 = vsel %vm883, 1, 0
    %v1012 = vsel %vm884, 1, 0
    %v1013 = vsel %vm885, 1, 0
    %v1014 = vsel %vm886, 1, 0
    %v1015 = vsel %vm887, 1, 0
    %v1016 = vsel %vm888, 1, 0
    %v1017 = vsel %vm889, 1, 0
    %v1018 = vsel %vm890, 1, 0
    %v1019 = vsel %vm891, 1, 0
    %v1020 = vsel %vm892, 1, 0
    %v1021 = vsel %vm893, 1, 0
    %v1022 = vsel %vm894, 1, 0
    %v1023 = vsel %vm895, 1, 0
    %v1024 = vsel %vm896, 1, 0
    %v1025 = vsel %vm897, 1, 0
    %v1026 = vsel %vm898, 1, 0
    %v1027 = vsel %vm899, 1, 0
    %v1028 = vsel %vm900, 1, 0
    %v1029 = vsel %vm901, 1, 0
    %v1030 = vsel %vm902, 1, 0
    %v1031 = vsel %vm903, 1, 0
    %v1032 = vsel %vm904, 1, 0
    %v1033 = vsel %vm905, 1, 0
    %v1034 = vsel %vm906, 1, 0
    %v1035 = vsel %vm907, 1, 0
    %v1036 = vsel %vm908, 1, 0
    %v1037 = vsel %vm909, 1, 0
    %v1038 = vsel %vm910, 1, 0
    %v1039 = vsel %vm911, 1, 0
    %v1040 = vsel %vm912, 1, 0
    %v1041 = vsel %vm913, 1, 0
    %v1042 = vsel %vm914, 1, 0
    %v1043 = vsel %vm915, 1, 0
    %v1044 = vsel %vm916, 1, 0
    %v1045 = vsel %vm917, 1, 0
    %v1046 = vsel %vm918, 1, 0
    %v1047 = vsel %vm919, 1, 0
    %v1048 = vsel %vm920, 1, 0
    %v1049 = vsel %vm921, 1, 0
    %v1050 = vsel %vm922, 1, 0
    %v1051 = vsel %vm923, 1, 0
    %v1052 = vcvt.s32.f32 %v924
    %v1053 = vcvt.s32.f32 %v925
    %v1054 = vcvt.s32.f32 %v926
    %v1055 = vcvt.s32.f32 %v927
    %v1056 = vcvt.s32.f32 %v928
    %v1057 = vcvt.s32.f32 %v929
    %v1058 = vcvt.s32.f32 %v930
    %v1059 = vcvt.s32.f32 %v931
    %v1060 = vcvt.s32.f32 %v932
    %v1061 = vcvt.s32.f32 %v933
    %v1062 = vcvt.s32.f32 %v934
    %v1063 = vcvt.s32.f32 %v935
    %v1064 = vcvt.s32.f32 %v936
    %v1065 = vcvt.s32.f32 %v937
    %v1066 = vcvt.s32.f32 %v938
    %v1067 = vcvt.s32.f32 %v939
    %v1068 = vcvt.s32.f32 %v940
    %v1069 = vcvt.s32.f32 %v941
    %v1070 = vcvt.s32.f32 %v942
    %v1071 = vcvt.s32.f32 %v943
    %v1072 = vcvt.s32.f32 %v944
    %v1073 = vcvt.s32.f32 %v945
    %v1074 = vcvt.s32.f32 %v946
    %v1075 = vcvt.s32.f32 %v947
    %v1076 = vcvt.s32.f32 %v948
    %v1077 = vcvt.s32.f32 %v949
    %v1078 = vcvt.s32.f32 %v950
    %v1079 = vcvt.s32.f32 %v951
    %v1080 = vcvt.s32.f32 %v952
    %v1081 = vcvt.s32.f32 %v953
    %v1082 = vcvt.s32.f32 %v954
    %v1083 = vcvt.s32.f32 %v955
    %v1084 = vcvt.s32.f32 %v956
    %v1085 = vcvt.s32.f32 %v957
    %v1086 = vcvt.s32.f32 %v958
    %v1087 = vcvt.s32.f32 %v959
    %v1088 = vcvt.s32.f32 %v960
    %v1089 = vcvt.s32.f32 %v961
    %v1090 = vcvt.s32.f32 %v962
    %v1091 = vcvt.s32.f32 %v963
    %v1092 = vcvt.s32.f32 %v964
    %v1093 = vcvt.s32.f32 %v965
    %v1094 = vcvt.s32.f32 %v966
    %v1095 = vcvt.s32.f32 %v967
    %v1096 = vcvt.s32.f32 %v968
    %v1097 = vcvt.s32.f32 %v969
    %v1098 = vcvt.s32.f32 %v970
    %v1099 = vcvt.s32.f32 %v971
    %v1100 = vcvt.s32.f32 %v972
    %v1101 = vcvt.s32.f32 %v973
    %v1102 = vcvt.s32.f32 %v974
    %v1103 = vcvt.s32.f32 %v975
    %v1104 = vcvt.s32.f32 %v976
    %v1105 = vcvt.s32.f32 %v977
    %v1106 = vcvt.s32.f32 %v978
    %v1107 = vcvt.s32.f32 %v979
    %v1108 = vcvt.s32.f32 %v980
    %v1109 = vcvt.s32.f32 %v981
    %v1110 = vcvt.s32.f32 %v982
    %v1111 = vcvt.s32.f32 %v983
    %v1112 = vcvt.s32.f32 %v984
    %v1113 = vcvt.s32.f32 %v985
    %v1114 = vcvt.s32.f32 %v986
    %v1115 = vcvt.s32.f32 %v987
    %v1116 = vcvt.s32.f32 %v988
    %v1117 = vcvt.s32.f32 %v989
    %v1118 = vcvt.s32.f32 %v990
    %v1119 = vcvt.s32.f32 %v991
    %v1120 = vcvt.s32.f32 %v992
    %v1121 = vcvt.s32.f32 %v993
    %v1122 = vcvt.s32.f32 %v994
    %v1123 = vcvt.s32.f32 %v995
    %v1124 = vcvt.s32.f32 %v996
    %v1125 = vcvt.s32.f32 %v997
    %v1126 = vcvt.s32.f32 %v998
    %v1127 = vcvt.s32.f32 %v999
    %v1128 = vcvt.s32.f32 %v1000
    %v1129 = vcvt.s32.f32 %v1001
    %v1130 = vcvt.s32.f32 %v1002
    %v1131 = vcvt.s32.f32 %v1003
    %v1132 = vcvt.s32.f32 %v1004
    %v1133 = vcvt.s32.f32 %v1005
    %v1134 = vcvt.s32.f32 %v1006
    %v1135 = vcvt.s32.f32 %v1007
    %v1136 = vcvt.s32.f32 %v1008
    %v1137 = vcvt.s32.f32 %v1009
    %v1138 = vcvt.s32.f32 %v1010
    %v1139 = vcvt.s32.f32 %v1011
    %v1140 = vcvt.s32.f32 %v1012
    %v1141 = vcvt.s32.f32 %v1013
    %v1142 = vcvt.s32.f32 %v1014
    %v1143 = vcvt.s32.f32 %v1015
    %v1144 = vcvt.s32.f32 %v1016
    %v1145 = vcvt.s32.f32 %v1017
    %v1146 = vcvt.s32.f32 %v1018
    %v1147 = vcvt.s32.f32 %v1019
    %v1148 = vcvt.s32.f32 %v1020
    %v1149 = vcvt.s32.f32 %v1021
    %v1150 = vcvt.s32.f32 %v1022
    %v1151 = vcvt.s32.f32 %v1023
    %v1152 = vcvt.s32.f32 %v1024
    %v1153 = vcvt.s32.f32 %v1025
    %v1154 = vcvt.s32.f32 %v1026
    %v1155 = vcvt.s32.f32 %v1027
    %v1156 = vcvt.s32.f32 %v1028
    %v1157 = vcvt.s32.f32 %v1029
    %v1158 = vcvt.s32.f32 %v1030
    %v1159 = vcvt.s32.f32 %v1031
    %v1160 = vcvt.s32.f32 %v1032
    %v1161 = vcvt.s32.f32 %v1033
    %v1162 = vcvt.s32.f32 %v1034
    %v1163 = vcvt.s32.f32 %v1035
    %v1164 = vcvt.s32.f32 %v1036
    %v1165 = vcvt.s32.f32 %v1037
    %v1166 = vcvt.s32.f32 %v1038
    %v1167 = vcvt.s32.f32 %v1039
    %v1168 = vcvt.s32.f32 %v1040
    %v1169 = vcvt.s32.f32 %v1041
    %v1170 = vcvt.s32.f32 %v1042
    %v1171 = vcvt.s32.f32 %v1043
    %v1172 = vcvt.s32.f32 %v1044
    %v1173 = vcvt.s32.f32 %v1045
    %v1174 = vcvt.s32.f32 %v1046
    %v1175 = vcvt.s32.f32 %v1047
    %v1176 = vcvt.s32.f32 %v1048
    %v1177 = vcvt.s32.f32 %v1049
    %v1178 = vcvt.s32.f32 %v1050
    %v1179 = vcvt.s32.f32 %v1051
    %v1180 = vpack.c.bf16 %v1053, %v1052
    %v1181 = vpack.c.bf16 %v1055, %v1054
    %v1182 = vpack.c.bf16 %v1057, %v1056
    %v1183 = vpack.c.bf16 %v1059, %v1058
    %v1184 = vpack.c.bf16 %v1061, %v1060
    %v1185 = vpack.c.bf16 %v1063, %v1062
    %v1186 = vpack.c.bf16 %v1065, %v1064
    %v1187 = vpack.c.bf16 %v1067, %v1066
    %v1188 = vpack.c.bf16 %v1069, %v1068
    %v1189 = vpack.c.bf16 %v1071, %v1070
    %v1190 = vpack.c.bf16 %v1073, %v1072
    %v1191 = vpack.c.bf16 %v1075, %v1074
    %v1192 = vpack.c.bf16 %v1077, %v1076
    %v1193 = vpack.c.bf16 %v1079, %v1078
    %v1194 = vpack.c.bf16 %v1081, %v1080
    %v1195 = vpack.c.bf16 %v1083, %v1082
    %v1196 = vpack.c.bf16 %v1085, %v1084
    %v1197 = vpack.c.bf16 %v1087, %v1086
    %v1198 = vpack.c.bf16 %v1089, %v1088
    %v1199 = vpack.c.bf16 %v1091, %v1090
    %v1200 = vpack.c.bf16 %v1093, %v1092
    %v1201 = vpack.c.bf16 %v1095, %v1094
    %v1202 = vpack.c.bf16 %v1097, %v1096
    %v1203 = vpack.c.bf16 %v1099, %v1098
    %v1204 = vpack.c.bf16 %v1101, %v1100
    %v1205 = vpack.c.bf16 %v1103, %v1102
    %v1206 = vpack.c.bf16 %v1105, %v1104
    %v1207 = vpack.c.bf16 %v1107, %v1106
    %v1208 = vpack.c.bf16 %v1109, %v1108
    %v1209 = vpack.c.bf16 %v1111, %v1110
    %v1210 = vpack.c.bf16 %v1113, %v1112
    %v1211 = vpack.c.bf16 %v1115, %v1114
    %v1212 = vpack.c.bf16 %v1117, %v1116
    %v1213 = vpack.c.bf16 %v1119, %v1118
    %v1214 = vpack.c.bf16 %v1121, %v1120
    %v1215 = vpack.c.bf16 %v1123, %v1122
    %v1216 = vpack.c.bf16 %v1125, %v1124
    %v1217 = vpack.c.bf16 %v1127, %v1126
    %v1218 = vpack.c.bf16 %v1129, %v1128
    %v1219 = vpack.c.bf16 %v1131, %v1130
    %v1220 = vpack.c.bf16 %v1133, %v1132
    %v1221 = vpack.c.bf16 %v1135, %v1134
    %v1222 = vpack.c.bf16 %v1137, %v1136
    %v1223 = vpack.c.bf16 %v1139, %v1138
    %v1224 = vpack.c.bf16 %v1141, %v1140
    %v1225 = vpack.c.bf16 %v1143, %v1142
    %v1226 = vpack.c.bf16 %v1145, %v1144
    %v1227 = vpack.c.bf16 %v1147, %v1146
    %v1228 = vpack.c.bf16 %v1149, %v1148
    %v1229 = vpack.c.bf16 %v1151, %v1150
    %v1230 = vpack.c.bf16 %v1153, %v1152
    %v1231 = vpack.c.bf16 %v1155, %v1154
    %v1232 = vpack.c.bf16 %v1157, %v1156
    %v1233 = vpack.c.bf16 %v1159, %v1158
    %v1234 = vpack.c.bf16 %v1161, %v1160
    %v1235 = vpack.c.bf16 %v1163, %v1162
    %v1236 = vpack.c.bf16 %v1165, %v1164
    %v1237 = vpack.c.bf16 %v1167, %v1166
    %v1238 = vpack.c.bf16 %v1169, %v1168
    %v1239 = vpack.c.bf16 %v1171, %v1170
    %v1240 = vpack.c.bf16 %v1173, %v1172
    %v1241 = vpack.c.bf16 %v1175, %v1174
    %v1242 = vpack.c.bf16 %v1177, %v1176
    %v1243 = vpack.c.bf16 %v1179, %v1178
    %v1245 = vcombine.high %v254, %v254
    %v1247 = vunpack.c.l.s4 1966171168
    %v1248 = vunpack.c.0.s8 %v1247
    %v1249 = vlaneseq
    %v1250 = vshrl.u32 %v1249, 7
    %v1251 = vsub.s32 %v1248, %v1250
    %v1252 = vrot.slane %v254, %v1251
    %v1254 = vunpack.c.l.s4 1966171168
    %v1255 = vunpack.c.0.s8 %v1254
    %v1256 = vlaneseq
    %v1257 = vshrl.u32 %v1256, 7
    %v1258 = vsub.s32 %v1255, %v1257
    %v1259 = vrot.slane %v1245, %v1258
    %v1260 = vcombine.high %v1252, %v1252
    %v1261 = vcombine.high %v1259, %v1259
    %v1263 = vunpack.c.l.s4 1966171168
    %v1264 = vunpack.c.0.s8 %v1263
    %v1265 = vlaneseq
    %v1266 = vshrl.u32 %v1265, 7
    %v1267 = vsub.s32 %v1264, %v1266
    %v1268 = vrot.slane %v1252, %v1267
    %v1270 = vunpack.c.l.s4 1966171168
    %v1271 = vunpack.c.0.s8 %v1270
    %v1272 = vlaneseq
    %v1273 = vshrl.u32 %v1272, 7
    %v1274 = vsub.s32 %v1271, %v1273
    %v1275 = vrot.slane %v1259, %v1274
    %v1277 = vunpack.c.l.s4 1966171168
    %v1278 = vunpack.c.0.s8 %v1277
    %v1279 = vlaneseq
    %v1280 = vshrl.u32 %v1279, 7
    %v1281 = vsub.s32 %v1278, %v1280
    %v1282 = vrot.slane %v1260, %v1281
    %v1284 = vunpack.c.l.s4 1966171168
    %v1285 = vunpack.c.0.s8 %v1284
    %v1286 = vlaneseq
    %v1287 = vshrl.u32 %v1286, 7
    %v1288 = vsub.s32 %v1285, %v1287
    %v1289 = vrot.slane %v1261, %v1288
    %v1290 = vcombine.high %v1268, %v1268
    %v1291 = vcombine.high %v1275, %v1275
    %v1292 = vcombine.high %v1282, %v1282
    %v1293 = vcombine.high %v1289, %v1289
    %v1302 = vpack.c.bf16 %v1268, %v1268
    %v1303 = vpack.c.bf16 %v1282, %v1282
    %v1304 = vpack.c.bf16 %v1290, %v1290
    %v1305 = vpack.c.bf16 %v1292, %v1292
    %v1306 = vpack.c.bf16 %v1275, %v1275
    %v1307 = vpack.c.bf16 %v1289, %v1289
    %v1308 = vpack.c.bf16 %v1291, %v1291
    %v1309 = vpack.c.bf16 %v1293, %v1293
    %1310 = vmatprep.subr.bf16.mxu0 0
    %1311 = vmatpush1.bf16.xpose.msra.mxu0 %v1180
    %1312 = vmatprep.subr.bf16.mxu0 0
    %1313 = vmatpush1.bf16.xpose.msra.mxu0 %v1181
    %1314 = vmatprep.subr.bf16.mxu0 0
    %1315 = vmatpush1.bf16.xpose.msra.mxu0 %v1182
    %1316 = vmatprep.subr.bf16.mxu0 0
    %1317 = vmatpush1.bf16.xpose.msra.mxu0 %v1183
    %1318 = vmatprep.subr.bf16.mxu0 0
    %1319 = vmatpush1.bf16.xpose.msra.mxu0 %v1184
    %1320 = vmatprep.subr.bf16.mxu0 0
    %1321 = vmatpush1.bf16.xpose.msra.mxu0 %v1185
    %1322 = vmatprep.subr.bf16.mxu0 0
    %1323 = vmatpush1.bf16.xpose.msra.mxu0 %v1186
    %1324 = vmatprep.subr.bf16.mxu0 0
    %1325 = vmatpush1.bf16.xpose.msra.mxu0 %v1187
    %1326 = vmatprep.subr.bf16.mxu0 0
    %1327 = vmatpush1.bf16.xpose.msra.mxu0 0
    %1328 = vmatprep.subr.bf16.mxu0 0
    %1329 = vmatpush1.bf16.xpose.msra.mxu0 0
    %1330 = vmatprep.subr.bf16.mxu0 0
    %1331 = vmatpush1.bf16.xpose.msra.mxu0 0
    %1332 = vmatprep.subr.bf16.mxu0 0
    %1333 = vmatpush1.bf16.xpose.msra.mxu0 0
    %1334 = vmatprep.subr.bf16.mxu0 0
    %1335 = vmatpush1.bf16.xpose.msra.mxu0 0
    %1336 = vmatprep.subr.bf16.mxu0 0
    %1337 = vmatpush1.bf16.xpose.msra.mxu0 0
    %1338 = vmatprep.subr.bf16.mxu0 0
    %1339 = vmatpush1.bf16.xpose.msra.mxu0 0
    %1340 = vmatprep.subr.bf16.mxu0 0
    %1341 = vmatpush1.bf16.xpose.msra.mxu0 0
    %1342 = vmatprep.mubr.bf16.mxu0 0
    %1343 = vmatmul.mubr.bf16.gmra.mrb[0].mxu0 %v1302
    %v1344 = vpop.f32.mrb[0].mxu0
    %v1345 = vadd.f32 0.0, %v1344
    %v1346 = vpop.f32.mrb[0].mxu0
    %v1347 = vpop.f32.mrb[0].mxu0
    %v1348 = vpop.f32.mrb[0].mxu0
    %1349 = vdwg.mxu0
    %1350 = vmatprep.subr.bf16.mxu0 0
    %1351 = vmatpush1.bf16.xpose.msra.mxu0 %v1188
    %1352 = vmatprep.subr.bf16.mxu0 0
    %1353 = vmatpush1.bf16.xpose.msra.mxu0 %v1189
    %1354 = vmatprep.subr.bf16.mxu0 0
    %1355 = vmatpush1.bf16.xpose.msra.mxu0 %v1190
    %1356 = vmatprep.subr.bf16.mxu0 0
    %1357 = vmatpush1.bf16.xpose.msra.mxu0 %v1191
    %1358 = vmatprep.subr.bf16.mxu0 0
    %1359 = vmatpush1.bf16.xpose.msra.mxu0 %v1192
    %1360 = vmatprep.subr.bf16.mxu0 0
    %1361 = vmatpush1.bf16.xpose.msra.mxu0 %v1193
    %1362 = vmatprep.subr.bf16.mxu0 0
    %1363 = vmatpush1.bf16.xpose.msra.mxu0 %v1194
    %1364 = vmatprep.subr.bf16.mxu0 0
    %1365 = vmatpush1.bf16.xpose.msra.mxu0 %v1195
    %1366 = vmatprep.subr.bf16.mxu0 0
    %1367 = vmatpush1.bf16.xpose.msra.mxu0 0
    %1368 = vmatprep.subr.bf16.mxu0 0
    %1369 = vmatpush1.bf16.xpose.msra.mxu0 0
    %1370 = vmatprep.subr.bf16.mxu0 0
    %1371 = vmatpush1.bf16.xpose.msra.mxu0 0
    %1372 = vmatprep.subr.bf16.mxu0 0
    %1373 = vmatpush1.bf16.xpose.msra.mxu0 0
    %1374 = vmatprep.subr.bf16.mxu0 0
    %1375 = vmatpush1.bf16.xpose.msra.mxu0 0
    %1376 = vmatprep.subr.bf16.mxu0 0
    %1377 = vmatpush1.bf16.xpose.msra.mxu0 0
    %1378 = vmatprep.subr.bf16.mxu0 0
    %1379 = vmatpush1.bf16.xpose.msra.mxu0 0
    %1380 = vmatprep.subr.bf16.mxu0 0
    %1381 = vmatpush1.bf16.xpose.msra.mxu0 0
    %1382 = vmatprep.mubr.bf16.mxu0 0
    %1383 = vmatmul.mubr.bf16.gmra.mrb[0].mxu0 %v1303
    %v1384 = vpop.f32.mrb[0].mxu0
    %v1385 = vadd.f32 0.0, %v1384
    %v1386 = vpop.f32.mrb[0].mxu0
    %v1387 = vpop.f32.mrb[0].mxu0
    %v1388 = vpop.f32.mrb[0].mxu0
    %1389 = vdwg.mxu0
    %1390 = vmatprep.subr.bf16.mxu0 0
    %1391 = vmatpush1.bf16.xpose.msra.mxu0 %v1196
    %1392 = vmatprep.subr.bf16.mxu0 0
    %1393 = vmatpush1.bf16.xpose.msra.mxu0 %v1197
    %1394 = vmatprep.subr.bf16.mxu0 0
    %1395 = vmatpush1.bf16.xpose.msra.mxu0 %v1198
    %1396 = vmatprep.subr.bf16.mxu0 0
    %1397 = vmatpush1.bf16.xpose.msra.mxu0 %v1199
    %1398 = vmatprep.subr.bf16.mxu0 0
    %1399 = vmatpush1.bf16.xpose.msra.mxu0 %v1200
    %1400 = vmatprep.subr.bf16.mxu0 0
    %1401 = vmatpush1.bf16.xpose.msra.mxu0 %v1201
    %1402 = vmatprep.subr.bf16.mxu0 0
    %1403 = vmatpush1.bf16.xpose.msra.mxu0 %v1202
    %1404 = vmatprep.subr.bf16.mxu0 0
    %1405 = vmatpush1.bf16.xpose.msra.mxu0 %v1203
    %1406 = vmatprep.subr.bf16.mxu0 0
    %1407 = vmatpush1.bf16.xpose.msra.mxu0 0
    %1408 = vmatprep.subr.bf16.mxu0 0
    %1409 = vmatpush1.bf16.xpose.msra.mxu0 0
    %1410 = vmatprep.subr.bf16.mxu0 0
    %1411 = vmatpush1.bf16.xpose.msra.mxu0 0
    %1412 = vmatprep.subr.bf16.mxu0 0
    %1413 = vmatpush1.bf16.xpose.msra.mxu0 0
    %1414 = vmatprep.subr.bf16.mxu0 0
    %1415 = vmatpush1.bf16.xpose.msra.mxu0 0
    %1416 = vmatprep.subr.bf16.mxu0 0
    %1417 = vmatpush1.bf16.xpose.msra.mxu0 0
    %1418 = vmatprep.subr.bf16.mxu0 0
    %1419 = vmatpush1.bf16.xpose.msra.mxu0 0
    %1420 = vmatprep.subr.bf16.mxu0 0
    %1421 = vmatpush1.bf16.xpose.msra.mxu0 0
    %1422 = vmatprep.mubr.bf16.mxu0 0
    %1423 = vmatmul.mubr.bf16.gmra.mrb[0].mxu0 %v1304
    %v1424 = vpop.f32.mrb[0].mxu0
    %v1425 = vadd.f32 0.0, %v1424
    %v1426 = vpop.f32.mrb[0].mxu0
    %v1427 = vpop.f32.mrb[0].mxu0
    %v1428 = vpop.f32.mrb[0].mxu0
    %1429 = vdwg.mxu0
    %1430 = vmatprep.subr.bf16.mxu0 0
    %1431 = vmatpush1.bf16.xpose.msra.mxu0 %v1204
    %1432 = vmatprep.subr.bf16.mxu0 0
    %1433 = vmatpush1.bf16.xpose.msra.mxu0 %v1205
    %1434 = vmatprep.subr.bf16.mxu0 0
    %1435 = vmatpush1.bf16.xpose.msra.mxu0 %v1206
    %1436 = vmatprep.subr.bf16.mxu0 0
    %1437 = vmatpush1.bf16.xpose.msra.mxu0 %v1207
    %1438 = vmatprep.subr.bf16.mxu0 0
    %1439 = vmatpush1.bf16.xpose.msra.mxu0 %v1208
    %1440 = vmatprep.subr.bf16.mxu0 0
    %1441 = vmatpush1.bf16.xpose.msra.mxu0 %v1209
    %1442 = vmatprep.subr.bf16.mxu0 0
    %1443 = vmatpush1.bf16.xpose.msra.mxu0 %v1210
    %1444 = vmatprep.subr.bf16.mxu0 0
    %1445 = vmatpush1.bf16.xpose.msra.mxu0 %v1211
    %1446 = vmatprep.subr.bf16.mxu0 0
    %1447 = vmatpush1.bf16.xpose.msra.mxu0 0
    %1448 = vmatprep.subr.bf16.mxu0 0
    %1449 = vmatpush1.bf16.xpose.msra.mxu0 0
    %1450 = vmatprep.subr.bf16.mxu0 0
    %1451 = vmatpush1.bf16.xpose.msra.mxu0 0
    %1452 = vmatprep.subr.bf16.mxu0 0
    %1453 = vmatpush1.bf16.xpose.msra.mxu0 0
    %1454 = vmatprep.subr.bf16.mxu0 0
    %1455 = vmatpush1.bf16.xpose.msra.mxu0 0
    %1456 = vmatprep.subr.bf16.mxu0 0
    %1457 = vmatpush1.bf16.xpose.msra.mxu0 0
    %1458 = vmatprep.subr.bf16.mxu0 0
    %1459 = vmatpush1.bf16.xpose.msra.mxu0 0
    %1460 = vmatprep.subr.bf16.mxu0 0
    %1461 = vmatpush1.bf16.xpose.msra.mxu0 0
    %1462 = vmatprep.mubr.bf16.mxu0 0
    %1463 = vmatmul.mubr.bf16.gmra.mrb[0].mxu0 %v1305
    %v1464 = vpop.f32.mrb[0].mxu0
    %v1465 = vadd.f32 0.0, %v1464
    %v1466 = vpop.f32.mrb[0].mxu0
    %v1467 = vpop.f32.mrb[0].mxu0
    %v1468 = vpop.f32.mrb[0].mxu0
    %1469 = vdwg.mxu0
    %1470 = vmatprep.subr.bf16.mxu0 0
    %1471 = vmatpush1.bf16.xpose.msra.mxu0 %v1212
    %1472 = vmatprep.subr.bf16.mxu0 0
    %1473 = vmatpush1.bf16.xpose.msra.mxu0 %v1213
    %1474 = vmatprep.subr.bf16.mxu0 0
    %1475 = vmatpush1.bf16.xpose.msra.mxu0 %v1214
    %1476 = vmatprep.subr.bf16.mxu0 0
    %1477 = vmatpush1.bf16.xpose.msra.mxu0 %v1215
    %1478 = vmatprep.subr.bf16.mxu0 0
    %1479 = vmatpush1.bf16.xpose.msra.mxu0 %v1216
    %1480 = vmatprep.subr.bf16.mxu0 0
    %1481 = vmatpush1.bf16.xpose.msra.mxu0 %v1217
    %1482 = vmatprep.subr.bf16.mxu0 0
    %1483 = vmatpush1.bf16.xpose.msra.mxu0 %v1218
    %1484 = vmatprep.subr.bf16.mxu0 0
    %1485 = vmatpush1.bf16.xpose.msra.mxu0 %v1219
    %1486 = vmatprep.subr.bf16.mxu0 0
    %1487 = vmatpush1.bf16.xpose.msra.mxu0 0
    %1488 = vmatprep.subr.bf16.mxu0 0
    %1489 = vmatpush1.bf16.xpose.msra.mxu0 0
    %1490 = vmatprep.subr.bf16.mxu0 0
    %1491 = vmatpush1.bf16.xpose.msra.mxu0 0
    %1492 = vmatprep.subr.bf16.mxu0 0
    %1493 = vmatpush1.bf16.xpose.msra.mxu0 0
    %1494 = vmatprep.subr.bf16.mxu0 0
    %1495 = vmatpush1.bf16.xpose.msra.mxu0 0
    %1496 = vmatprep.subr.bf16.mxu0 0
    %1497 = vmatpush1.bf16.xpose.msra.mxu0 0
    %1498 = vmatprep.subr.bf16.mxu0 0
    %1499 = vmatpush1.bf16.xpose.msra.mxu0 0
    %1500 = vmatprep.subr.bf16.mxu0 0
    %1501 = vmatpush1.bf16.xpose.msra.mxu0 0
    %1502 = vmatprep.mubr.bf16.mxu0 0
    %1503 = vmatmul.mubr.bf16.gmra.mrb[0].mxu0 %v1306
    %v1504 = vpop.f32.mrb[0].mxu0
    %v1505 = vadd.f32 0.0, %v1504
    %v1506 = vpop.f32.mrb[0].mxu0
    %v1507 = vpop.f32.mrb[0].mxu0
    %v1508 = vpop.f32.mrb[0].mxu0
    %1509 = vdwg.mxu0
    %1510 = vmatprep.subr.bf16.mxu0 0
    %1511 = vmatpush1.bf16.xpose.msra.mxu0 %v1220
    %1512 = vmatprep.subr.bf16.mxu0 0
    %1513 = vmatpush1.bf16.xpose.msra.mxu0 %v1221
    %1514 = vmatprep.subr.bf16.mxu0 0
    %1515 = vmatpush1.bf16.xpose.msra.mxu0 %v1222
    %1516 = vmatprep.subr.bf16.mxu0 0
    %1517 = vmatpush1.bf16.xpose.msra.mxu0 %v1223
    %1518 = vmatprep.subr.bf16.mxu0 0
    %1519 = vmatpush1.bf16.xpose.msra.mxu0 %v1224
    %1520 = vmatprep.subr.bf16.mxu0 0
    %1521 = vmatpush1.bf16.xpose.msra.mxu0 %v1225
    %1522 = vmatprep.subr.bf16.mxu0 0
    %1523 = vmatpush1.bf16.xpose.msra.mxu0 %v1226
    %1524 = vmatprep.subr.bf16.mxu0 0
    %1525 = vmatpush1.bf16.xpose.msra.mxu0 %v1227
    %1526 = vmatprep.subr.bf16.mxu0 0
    %1527 = vmatpush1.bf16.xpose.msra.mxu0 0
    %1528 = vmatprep.subr.bf16.mxu0 0
    %1529 = vmatpush1.bf16.xpose.msra.mxu0 0
    %1530 = vmatprep.subr.bf16.mxu0 0
    %1531 = vmatpush1.bf16.xpose.msra.mxu0 0
    %1532 = vmatprep.subr.bf16.mxu0 0
    %1533 = vmatpush1.bf16.xpose.msra.mxu0 0
    %1534 = vmatprep.subr.bf16.mxu0 0
    %1535 = vmatpush1.bf16.xpose.msra.mxu0 0
    %1536 = vmatprep.subr.bf16.mxu0 0
    %1537 = vmatpush1.bf16.xpose.msra.mxu0 0
    %1538 = vmatprep.subr.bf16.mxu0 0
    %1539 = vmatpush1.bf16.xpose.msra.mxu0 0
    %1540 = vmatprep.subr.bf16.mxu0 0
    %1541 = vmatpush1.bf16.xpose.msra.mxu0 0
    %1542 = vmatprep.mubr.bf16.mxu0 0
    %1543 = vmatmul.mubr.bf16.gmra.mrb[0].mxu0 %v1307
    %v1544 = vpop.f32.mrb[0].mxu0
    %v1545 = vadd.f32 0.0, %v1544
    %v1546 = vpop.f32.mrb[0].mxu0
    %v1547 = vpop.f32.mrb[0].mxu0
    %v1548 = vpop.f32.mrb[0].mxu0
    %1549 = vdwg.mxu0
    %1550 = vmatprep.subr.bf16.mxu0 0
    %1551 = vmatpush1.bf16.xpose.msra.mxu0 %v1228
    %1552 = vmatprep.subr.bf16.mxu0 0
    %1553 = vmatpush1.bf16.xpose.msra.mxu0 %v1229
    %1554 = vmatprep.subr.bf16.mxu0 0
    %1555 = vmatpush1.bf16.xpose.msra.mxu0 %v1230
    %1556 = vmatprep.subr.bf16.mxu0 0
    %1557 = vmatpush1.bf16.xpose.msra.mxu0 %v1231
    %1558 = vmatprep.subr.bf16.mxu0 0
    %1559 = vmatpush1.bf16.xpose.msra.mxu0 %v1232
    %1560 = vmatprep.subr.bf16.mxu0 0
    %1561 = vmatpush1.bf16.xpose.msra.mxu0 %v1233
    %1562 = vmatprep.subr.bf16.mxu0 0
    %1563 = vmatpush1.bf16.xpose.msra.mxu0 %v1234
    %1564 = vmatprep.subr.bf16.mxu0 0
    %1565 = vmatpush1.bf16.xpose.msra.mxu0 %v1235
    %1566 = vmatprep.subr.bf16.mxu0 0
    %1567 = vmatpush1.bf16.xpose.msra.mxu0 0
    %1568 = vmatprep.subr.bf16.mxu0 0
    %1569 = vmatpush1.bf16.xpose.msra.mxu0 0
    %1570 = vmatprep.subr.bf16.mxu0 0
    %1571 = vmatpush1.bf16.xpose.msra.mxu0 0
    %1572 = vmatprep.subr.bf16.mxu0 0
    %1573 = vmatpush1.bf16.xpose.msra.mxu0 0
    %1574 = vmatprep.subr.bf16.mxu0 0
    %1575 = vmatpush1.bf16.xpose.msra.mxu0 0
    %1576 = vmatprep.subr.bf16.mxu0 0
    %1577 = vmatpush1.bf16.xpose.msra.mxu0 0
    %1578 = vmatprep.subr.bf16.mxu0 0
    %1579 = vmatpush1.bf16.xpose.msra.mxu0 0
    %1580 = vmatprep.subr.bf16.mxu0 0
    %1581 = vmatpush1.bf16.xpose.msra.mxu0 0
    %1582 = vmatprep.mubr.bf16.mxu0 0
    %1583 = vmatmul.mubr.bf16.gmra.mrb[0].mxu0 %v1308
    %v1584 = vpop.f32.mrb[0].mxu0
    %v1585 = vadd.f32 0.0, %v1584
    %v1586 = vpop.f32.mrb[0].mxu0
    %v1587 = vpop.f32.mrb[0].mxu0
    %v1588 = vpop.f32.mrb[0].mxu0
    %1589 = vdwg.mxu0
    %1590 = vmatprep.subr.bf16.mxu0 0
    %1591 = vmatpush1.bf16.xpose.msra.mxu0 %v1236
    %1592 = vmatprep.subr.bf16.mxu0 0
    %1593 = vmatpush1.bf16.xpose.msra.mxu0 %v1237
    %1594 = vmatprep.subr.bf16.mxu0 0
    %1595 = vmatpush1.bf16.xpose.msra.mxu0 %v1238
    %1596 = vmatprep.subr.bf16.mxu0 0
    %1597 = vmatpush1.bf16.xpose.msra.mxu0 %v1239
    %1598 = vmatprep.subr.bf16.mxu0 0
    %1599 = vmatpush1.bf16.xpose.msra.mxu0 %v1240
    %1600 = vmatprep.subr.bf16.mxu0 0
    %1601 = vmatpush1.bf16.xpose.msra.mxu0 %v1241
    %1602 = vmatprep.subr.bf16.mxu0 0
    %1603 = vmatpush1.bf16.xpose.msra.mxu0 %v1242
    %1604 = vmatprep.subr.bf16.mxu0 0
    %1605 = vmatpush1.bf16.xpose.msra.mxu0 %v1243
    %1606 = vmatprep.subr.bf16.mxu0 0
    %1607 = vmatpush1.bf16.xpose.msra.mxu0 0
    %1608 = vmatprep.subr.bf16.mxu0 0
    %1609 = vmatpush1.bf16.xpose.msra.mxu0 0
    %1610 = vmatprep.subr.bf16.mxu0 0
    %1611 = vmatpush1.bf16.xpose.msra.mxu0 0
    %1612 = vmatprep.subr.bf16.mxu0 0
    %1613 = vmatpush1.bf16.xpose.msra.mxu0 0
    %1614 = vmatprep.subr.bf16.mxu0 0
    %1615 = vmatpush1.bf16.xpose.msra.mxu0 0
    %1616 = vmatprep.subr.bf16.mxu0 0
    %1617 = vmatpush1.bf16.xpose.msra.mxu0 0
    %1618 = vmatprep.subr.bf16.mxu0 0
    %1619 = vmatpush1.bf16.xpose.msra.mxu0 0
    %1620 = vmatprep.subr.bf16.mxu0 0
    %1621 = vmatpush1.bf16.xpose.msra.mxu0 0
    %1622 = vmatprep.mubr.bf16.mxu0 0
    %1623 = vmatmul.mubr.bf16.gmra.mrb[0].mxu0 %v1309
    %v1624 = vpop.f32.mrb[0].mxu0
    %v1625 = vadd.f32 0.0, %v1624
    %v1626 = vpop.f32.mrb[0].mxu0
    %v1627 = vpop.f32.mrb[0].mxu0
    %v1628 = vpop.f32.mrb[0].mxu0
    %1629 = vdwg.mxu0
    %1630 = vst [vmem:[#allocation2] sm:$0x1] %v1345
    %1631 = vst [vmem:[#allocation2 + $0x1] sm:$0x1] %v1385
    %1632 = vst [vmem:[#allocation2 + $0x2] sm:$0x1] %v1425
    %1633 = vst [vmem:[#allocation2 + $0x3] sm:$0x1] %v1465
    %1634 = vst [vmem:[#allocation2 + $0x4] sm:$0x1] %v1505
    %1635 = vst [vmem:[#allocation2 + $0x5] sm:$0x1] %v1545
    %1636 = vst [vmem:[#allocation2 + $0x6] sm:$0x1] %v1585
    %1637 = vst [vmem:[#allocation2 + $0x7] sm:$0x1] %v1625
    // Predicated region
    $region26: #{tpu_custom_call.1} parent=1 // pred_check
      _
    $region27: #{tpu_custom_call.1} parent=1 // pred_check_branch
      %1639 = sbr.rel (0) target = $region29
    $region28: #{tpu_custom_call.1} parent=1 // pred_region
      %s1641 = ssub.s32 128, 128
      %1642 = vsyncadd [#allocation3], %s1641
      %s1644 = sshll.u32 [#allocation2], 4
      %s1645 = int_to_ptr.vmem [resolvable:$true] %s1644
      %1647 = dma.vmem_to_hbm [thread:$0]  %s1645, 128, %s6, [#allocation3]
    $region29: #{tpu_custom_call.1} parent=1 // pred_fallthru
      _
    // Predicated region
    $region30: #{tpu_custom_call.1} parent=1 // pred_check
      _
    $region31: #{tpu_custom_call.1} parent=1 // pred_check_branch
      %1649 = sbr.rel (0) target = $region33
    $region32: #{tpu_custom_call.1} parent=1 // pred_region
      %1650 = dma.done [#allocation3], 128
    $region33: #{tpu_custom_call.1} parent=1 // pred_fallthru
      _
    %1651 = vsyncpa [#allocation3], 1

</llo_original>
